<compile_context>
chip_gen: v7x
topology: tpu7x:2x2x1
jax: 0.10.0
libtpu: 0.0.40
codegen_flags: <defaults>
</compile_context>

<pallas_src>
import functools

import jax
import jax.numpy as jnp
from jax import lax
from jax.experimental import pallas as pl
from jax.experimental.pallas import tpu as pltpu


def _round_up(x, m):
    return (x + m - 1) // m * m


def _edge_predictor_kernel(tile_n, e_pad,
                           idx_ref,                        # SMEM (2*NP,) int32 (scalar prefetch)
                           feat_ref,                        # HBM  (num_nodes, e_pad) f32  (pl.ANY)
                           w0_ref, b0_ref, w1_ref, b1_ref,  # VMEM, constant blocks
                           out_ref,                         # VMEM (tile_n, c_pad) f32
                           a_buf, b_buf, sem):              # VMEM scratch + DMA sems
    i = pl.program_id(0)
    base = i * tile_n

    # ---- fused embedding gather: DMA the 2*tile_n needed feature rows -------
    def _issue(r, carry):
        ia = idx_ref[2 * (base + r)]
        ib = idx_ref[2 * (base + r) + 1]
        pltpu.make_async_copy(feat_ref.at[ia], a_buf.at[r], sem.at[0]).start()
        pltpu.make_async_copy(feat_ref.at[ib], b_buf.at[r], sem.at[1]).start()
        return carry

    lax.fori_loop(0, tile_n, _issue, 0)

    def _drain(r, carry):
        # Same-shaped dummy descriptors: each wait consumes one completed copy
        # (all row copies have identical size), standard paged-attention trick.
        pltpu.make_async_copy(feat_ref.at[0], a_buf.at[0], sem.at[0]).wait()
        pltpu.make_async_copy(feat_ref.at[0], b_buf.at[0], sem.at[1]).wait()
        return carry

    lax.fori_loop(0, tile_n, _drain, 0)

    a = a_buf[...]                      # (tile_n, e_pad) f32, lanes >= E are zero
    b = b_buf[...]

    # Elementwise combine (VPU)
    s = a + b                           # nodes_aplusb
    p = a * b                           # nodes_ab
    d = jnp.abs(a - b)                  # nodes_aminusb

    # lin0 on "concat([s, p, d], 1)" folded into 3 partial matmuls (exact, MXU,
    # K = e_pad = 128 per pass). Padded hidden lanes give sigmoid(0)=0.5 but
    # multiply zero rows of W1, contributing nothing.
    h = (jnp.dot(s, w0_ref[0:e_pad, :],            preferred_element_type=jnp.float32)
         + jnp.dot(p, w0_ref[e_pad:2 * e_pad, :],  preferred_element_type=jnp.float32)
         + jnp.dot(d, w0_ref[2 * e_pad:3 * e_pad, :], preferred_element_type=jnp.float32)
         + b0_ref[...])
    fc1 = jax.nn.sigmoid(h)

    # lin1 -> lane-dense (tile_n, c_pad) unmasked store.
    out_ref[...] = (jnp.dot(fc1, w1_ref[...], preferred_element_type=jnp.float32)
                    + b1_ref[...])


def edge_predictor_forward(features, nodes, w0, b0, w1, b1, *, tile_n=256):
    """features: (num_nodes, E) f32 table; nodes: (N, 2) int; weights stored [in, out]."""
    features = jnp.asarray(features, jnp.float32)
    nodes = jnp.asarray(nodes, jnp.int32)
    w0 = jnp.asarray(w0, jnp.float32)
    w1 = jnp.asarray(w1, jnp.float32)
    b0 = jnp.asarray(b0, jnp.float32).reshape(1, -1)
    b1 = jnp.asarray(b1, jnp.float32).reshape(1, -1)

    num_tbl, E = features.shape
    H = w0.shape[1]                     # == E in the module
    C = w1.shape[1]
    N = nodes.shape[0]

    E_PAD = _round_up(E, 128)
    H_PAD = _round_up(H, 128)
    C_PAD = _round_up(C, 128)

    tile_n = max(8, _round_up(tile_n, 8))
    num_tiles = pl.cdiv(N, tile_n)
    NP = num_tiles * tile_n

    # Zero-padded, lane-dense parameter / embedding-table layouts (exact math:
    # padded activation lanes are 0; padded hidden units see zero W1 rows;
    # padded class lanes are sliced off at the end).
    feat_pad = jnp.zeros((num_tbl, E_PAD), jnp.float32).at[:, :E].set(features)
    w0p = jnp.zeros((3 * E_PAD, H_PAD), jnp.float32)
    for t in range(3):
        w0p = w0p.at[t * E_PAD:t * E_PAD + E, :H].set(w0[t * E:(t + 1) * E, :])
    b0p = jnp.zeros((1, H_PAD), jnp.float32).at[:, :H].set(b0)
    w1p = jnp.zeros((H_PAD, C_PAD), jnp.float32).at[:H, :C].set(w1)
    b1p = jnp.zeros((1, C_PAD), jnp.float32).at[:, :C].set(b1)

    # Node indices, padded to a whole number of tiles (pad rows -> node 0, safe)
    # and flattened [a0, b0, a1, b1, ...] for cheap 1-D SMEM scalar prefetch.
    idx_flat = (jnp.zeros((NP, 2), jnp.int32).at[:N].set(nodes)).reshape(-1)

    kernel = functools.partial(_edge_predictor_kernel, tile_n, E_PAD)

    # VMEM budget per core (f32): weights+biases ~ (3*E_PAD*H_PAD + H_PAD*C_PAD)
    # = ~256 KiB, 2x output buffers = 2*tile_n*C_PAD*4, gather scratch
    # = 2*tile_n*E_PAD*4  -> ~1 MiB at tile_n=256; well under the 32 MiB scoped
    # default of v7x (64 MiB physical) and the 128 MiB of v5e/v6e.
    grid_spec = pltpu.PrefetchScalarGridSpec(
        num_scalar_prefetch=1,
        grid=(num_tiles,),
        in_specs=[
            pl.BlockSpec(memory_space=pl.ANY),                        # features (stays in HBM)
            pl.BlockSpec((3 * E_PAD, H_PAD), lambda i, idx: (0, 0)),  # W0 (resident)
            pl.BlockSpec((1, H_PAD),         lambda i, idx: (0, 0)),  # b0 (resident)
            pl.BlockSpec((H_PAD, C_PAD),     lambda i, idx: (0, 0)),  # W1 (resident)
            pl.BlockSpec((1, C_PAD),         lambda i, idx: (0, 0)),  # b1 (resident)
        ],
        out_specs=pl.BlockSpec((tile_n, C_PAD), lambda i, idx: (i, 0)),
        scratch_shapes=[
            pltpu.VMEM((tile_n, E_PAD), jnp.float32),   # gathered a rows
            pltpu.VMEM((tile_n, E_PAD), jnp.float32),   # gathered b rows
            pltpu.SemaphoreType.DMA((2,)),
        ],
    )

    scores_pad = pl.pallas_call(
        kernel,
        out_shape=jax.ShapeDtypeStruct((NP, C_PAD), jnp.float32),
        grid_spec=grid_spec,
        compiler_params=pltpu.CompilerParams(
            dimension_semantics=("parallel",),          # shard rows over v7x's 2 TCs
            vmem_limit_bytes=32 * 1024 * 1024,
        ),
    )(idx_flat, feat_pad, w0p, b0p, w1p, b1p)

    return scores_pad[:N, :C]


def xavier_uniform(key, shape):
    fan_in, fan_out = shape
    limit = jnp.sqrt(6.0 / (fan_in + fan_out))
    return jax.random.uniform(key, shape, jnp.float32, -limit, limit)


if __name__ == "__main__":
    emb_size = 32
    nb_classes = 2
    num_nodes = 64
    num_edges = 600            # > TILE_N so the row grid actually has several tiles

    key = jax.random.PRNGKey(0)
    k_feat, k_nodes, k_w0, k_b0, k_w1, k_b1 = jax.random.split(key, 6)

    # Deterministic synthetic "features" embedding table and edge list.
    features = jax.random.normal(k_feat, (num_nodes, emb_size), jnp.float32)
    nodes = jax.random.randint(k_nodes, (num_edges, 2), 0, num_nodes, jnp.int32)

    # Parameters (matching nn.Linear shapes, stored as [in, out]):
    #   lin0: Linear(3*E, E)  -> W0 (3E, E), b0 (1, E)
    #   lin1: Linear(E, C)    -> W1 (E, C),  b1 (1, C)
    w0 = xavier_uniform(k_w0, (3 * emb_size, emb_size))
    b0 = jax.random.uniform(k_b0, (1, emb_size), jnp.float32,
                            -1.0 / jnp.sqrt(3.0 * emb_size),
                            1.0 / jnp.sqrt(3.0 * emb_size))
    w1 = xavier_uniform(k_w1, (emb_size, nb_classes))
    b1 = jax.random.uniform(k_b1, (1, nb_classes), jnp.float32,
                            -1.0 / jnp.sqrt(emb_size),
                            1.0 / jnp.sqrt(emb_size))

    scores = edge_predictor_forward(features, nodes, w0, b0, w1, b1, tile_n=256)
    scores = jax.block_until_ready(scores)

    # Cross-check against a pure-JAX reference of the same forward.
    a = features[nodes[:, 0]]
    b = features[nodes[:, 1]]
    con1 = jnp.concatenate([a + b, a * b, jnp.abs(a - b)], axis=1)
    fc1 = jax.nn.sigmoid(con1 @ w0 + b0)
    ref = fc1 @ w1 + b1

    assert scores.shape == (num_edges, nb_classes)
    max_err = float(jnp.max(jnp.abs(scores - ref)))
    assert jnp.allclose(scores, ref, atol=1e-4, rtol=1e-4), f"max_err={max_err}"

    print("KERNEL_OK")
</pallas_src>

<mosaic_0001>
module attributes {stable_mosaic.version = 11 : i64} {
  func.func @_edge_predictor_kernel(%arg0: i32, %arg1: memref<1536xi32, #tpu.memory_space<smem>>, %arg2: memref<64x128xf32, #tpu.memory_space<any>>, %arg3: memref<384x128xf32, #tpu.memory_space<vmem>>, %arg4: memref<1x128xf32, #tpu.memory_space<vmem>>, %arg5: memref<128x128xf32, #tpu.memory_space<vmem>>, %arg6: memref<1x128xf32, #tpu.memory_space<vmem>>, %arg7: memref<256x128xf32, #tpu.memory_space<vmem>>, %arg8: memref<256x128xf32, #tpu.memory_space<vmem>>, %arg9: memref<256x128xf32, #tpu.memory_space<vmem>>, %arg10: memref<2x!tpu.dma_semaphore, #tpu.memory_space<semaphore_mem>>) attributes {dimension_semantics = [#tpu.dimension_semantics<parallel>], iteration_bounds = array<i64: 3>, scalar_prefetch = 1 : i64, scratch_operands = 3 : i64, tpu.core_type = #tpu.core_type<tc>, window_params = [{}, {pipeline_mode = #tpu.pipeline_mode<synchronous>, transform_indices = @transform_1, window_bounds = array<i64: 384, 128>}, {pipeline_mode = #tpu.pipeline_mode<synchronous>, transform_indices = @transform_2, window_bounds = array<i64: 1, 128>}, {pipeline_mode = #tpu.pipeline_mode<synchronous>, transform_indices = @transform_3, window_bounds = array<i64: 128, 128>}, {pipeline_mode = #tpu.pipeline_mode<synchronous>, transform_indices = @transform_4, window_bounds = array<i64: 1, 128>}, {transform_indices = @transform_5, window_bounds = array<i64: 256, 128>}]} {
    %c256_i32 = arith.constant 256 : i32
    %0 = arith.muli %arg0, %c256_i32 : i32
    %c0_i32 = arith.constant 0 : i32
    %c256_i32_0 = arith.constant 256 : i32
    %1 = arith.addi %c0_i32, %c256_i32_0 : i32
    %c1_i32 = arith.constant 1 : i32
    scf.for %arg11 = %c0_i32 to %1 step %c1_i32  : i32 {
      %31 = arith.addi %0, %arg11 : i32
      %c2_i32 = arith.constant 2 : i32
      %32 = arith.muli %c2_i32, %31 : i32
      %33 = arith.index_cast %32 : i32 to index
      %34 = memref.load %arg1[%33] : memref<1536xi32, #tpu.memory_space<smem>>
      %35 = arith.addi %0, %arg11 : i32
      %c2_i32_24 = arith.constant 2 : i32
      %36 = arith.muli %c2_i32_24, %35 : i32
      %c1_i32_25 = arith.constant 1 : i32
      %37 = arith.addi %36, %c1_i32_25 : i32
      %38 = arith.index_cast %37 : i32 to index
      %39 = memref.load %arg1[%38] : memref<1536xi32, #tpu.memory_space<smem>>
      %c0_i32_26 = arith.constant 0 : i32
      %c0_i32_27 = arith.constant 0 : i32
      %40 = tpu.memref_slice %arg2[%34, %c0_i32_27] : memref<64x128xf32, #tpu.memory_space<any>> -> memref<1x128xf32, #tpu.memory_space<any>>
      %41 = tpu.memref_squeeze %40 : memref<1x128xf32, #tpu.memory_space<any>> -> memref<128xf32, #tpu.memory_space<any>>
      %c0_i32_28 = arith.constant 0 : i32
      %42 = tpu.memref_slice %arg8[%arg11, %c0_i32_28] : memref<256x128xf32, #tpu.memory_space<vmem>> -> memref<1x128xf32, #tpu.memory_space<vmem>>
      %43 = tpu.memref_squeeze %42 : memref<1x128xf32, #tpu.memory_space<vmem>> -> memref<128xf32, #tpu.memory_space<vmem>>
      %44 = tpu.memref_slice %arg10[%c0_i32_26] : memref<2x!tpu.dma_semaphore, #tpu.memory_space<semaphore_mem>> -> memref<1x!tpu.dma_semaphore, #tpu.memory_space<semaphore_mem>>
      %45 = tpu.memref_squeeze %44 : memref<1x!tpu.dma_semaphore, #tpu.memory_space<semaphore_mem>> -> memref<!tpu.dma_semaphore, #tpu.memory_space<semaphore_mem>>
      tpu.enqueue_dma source(%41 : memref<128xf32, #tpu.memory_space<any>>) target(%43 : memref<128xf32, #tpu.memory_space<vmem>>) target_semaphore(%45 : memref<!tpu.dma_semaphore, #tpu.memory_space<semaphore_mem>>)
      %c1_i32_29 = arith.constant 1 : i32
      %c0_i32_30 = arith.constant 0 : i32
      %46 = tpu.memref_slice %arg2[%39, %c0_i32_30] : memref<64x128xf32, #tpu.memory_space<any>> -> memref<1x128xf32, #tpu.memory_space<any>>
      %47 = tpu.memref_squeeze %46 : memref<1x128xf32, #tpu.memory_space<any>> -> memref<128xf32, #tpu.memory_space<any>>
      %c0_i32_31 = arith.constant 0 : i32
      %48 = tpu.memref_slice %arg9[%arg11, %c0_i32_31] : memref<256x128xf32, #tpu.memory_space<vmem>> -> memref<1x128xf32, #tpu.memory_space<vmem>>
      %49 = tpu.memref_squeeze %48 : memref<1x128xf32, #tpu.memory_space<vmem>> -> memref<128xf32, #tpu.memory_space<vmem>>
      %50 = tpu.memref_slice %arg10[%c1_i32_29] : memref<2x!tpu.dma_semaphore, #tpu.memory_space<semaphore_mem>> -> memref<1x!tpu.dma_semaphore, #tpu.memory_space<semaphore_mem>>
      %51 = tpu.memref_squeeze %50 : memref<1x!tpu.dma_semaphore, #tpu.memory_space<semaphore_mem>> -> memref<!tpu.dma_semaphore, #tpu.memory_space<semaphore_mem>>
      tpu.enqueue_dma source(%47 : memref<128xf32, #tpu.memory_space<any>>) target(%49 : memref<128xf32, #tpu.memory_space<vmem>>) target_semaphore(%51 : memref<!tpu.dma_semaphore, #tpu.memory_space<semaphore_mem>>)
    }
    %c256_i32_1 = arith.constant 256 : i32
    %c0_i32_2 = arith.constant 0 : i32
    %c256_i32_3 = arith.constant 256 : i32
    %2 = arith.addi %c0_i32_2, %c256_i32_3 : i32
    %c1_i32_4 = arith.constant 1 : i32
    scf.for %arg11 = %c0_i32_2 to %2 step %c1_i32_4  : i32 {
      %c0_i32_24 = arith.constant 0 : i32
      %c0_i32_25 = arith.constant 0 : i32
      %c0_i32_26 = arith.constant 0 : i32
      %c0_i32_27 = arith.constant 0 : i32
      %31 = tpu.memref_slice %arg2[%c0_i32_24, %c0_i32_27] : memref<64x128xf32, #tpu.memory_space<any>> -> memref<1x128xf32, #tpu.memory_space<any>>
      %32 = tpu.memref_squeeze %31 : memref<1x128xf32, #tpu.memory_space<any>> -> memref<128xf32, #tpu.memory_space<any>>
      %c0_i32_28 = arith.constant 0 : i32
      %33 = tpu.memref_slice %arg8[%c0_i32_25, %c0_i32_28] : memref<256x128xf32, #tpu.memory_space<vmem>> -> memref<1x128xf32, #tpu.memory_space<vmem>>
      %34 = tpu.memref_squeeze %33 : memref<1x128xf32, #tpu.memory_space<vmem>> -> memref<128xf32, #tpu.memory_space<vmem>>
      %35 = tpu.memref_slice %arg10[%c0_i32_26] : memref<2x!tpu.dma_semaphore, #tpu.memory_space<semaphore_mem>> -> memref<1x!tpu.dma_semaphore, #tpu.memory_space<semaphore_mem>>
      %36 = tpu.memref_squeeze %35 : memref<1x!tpu.dma_semaphore, #tpu.memory_space<semaphore_mem>> -> memref<!tpu.dma_semaphore, #tpu.memory_space<semaphore_mem>>
      tpu.wait_dma2 semaphore(%36 : memref<!tpu.dma_semaphore, #tpu.memory_space<semaphore_mem>>) src(%32 : memref<128xf32, #tpu.memory_space<any>>) dst(%34 : memref<128xf32, #tpu.memory_space<vmem>>)
      %c0_i32_29 = arith.constant 0 : i32
      %c0_i32_30 = arith.constant 0 : i32
      %c1_i32_31 = arith.constant 1 : i32
      %c0_i32_32 = arith.constant 0 : i32
      %37 = tpu.memref_slice %arg2[%c0_i32_29, %c0_i32_32] : memref<64x128xf32, #tpu.memory_space<any>> -> memref<1x128xf32, #tpu.memory_space<any>>
      %38 = tpu.memref_squeeze %37 : memref<1x128xf32, #tpu.memory_space<any>> -> memref<128xf32, #tpu.memory_space<any>>
      %c0_i32_33 = arith.constant 0 : i32
      %39 = tpu.memref_slice %arg9[%c0_i32_30, %c0_i32_33] : memref<256x128xf32, #tpu.memory_space<vmem>> -> memref<1x128xf32, #tpu.memory_space<vmem>>
      %40 = tpu.memref_squeeze %39 : memref<1x128xf32, #tpu.memory_space<vmem>> -> memref<128xf32, #tpu.memory_space<vmem>>
      %41 = tpu.memref_slice %arg10[%c1_i32_31] : memref<2x!tpu.dma_semaphore, #tpu.memory_space<semaphore_mem>> -> memref<1x!tpu.dma_semaphore, #tpu.memory_space<semaphore_mem>>
      %42 = tpu.memref_squeeze %41 : memref<1x!tpu.dma_semaphore, #tpu.memory_space<semaphore_mem>> -> memref<!tpu.dma_semaphore, #tpu.memory_space<semaphore_mem>>
      tpu.wait_dma2 semaphore(%42 : memref<!tpu.dma_semaphore, #tpu.memory_space<semaphore_mem>>) src(%38 : memref<128xf32, #tpu.memory_space<any>>) dst(%40 : memref<128xf32, #tpu.memory_space<vmem>>)
    }
    %c0 = arith.constant 0 : index
    %c0_5 = arith.constant 0 : index
    %3 = vector.load %arg8[%c0, %c0_5] : memref<256x128xf32, #tpu.memory_space<vmem>>, vector<256x128xf32>
    %c0_6 = arith.constant 0 : index
    %c0_7 = arith.constant 0 : index
    %4 = vector.load %arg9[%c0_6, %c0_7] : memref<256x128xf32, #tpu.memory_space<vmem>>, vector<256x128xf32>
    %5 = arith.addf %3, %4 : vector<256x128xf32>
    %6 = arith.mulf %3, %4 : vector<256x128xf32>
    %7 = arith.subf %3, %4 : vector<256x128xf32>
    %8 = math.absf %7 : vector<256x128xf32>
    %c0_8 = arith.constant 0 : index
    %c0_9 = arith.constant 0 : index
    %9 = vector.load %arg3[%c0_8, %c0_9] : memref<384x128xf32, #tpu.memory_space<vmem>>, vector<128x128xf32>
    %cst = arith.constant dense<0.000000e+00> : vector<256x128xf32>
    %10 = tpu.matmul %5, %9, %cst {dimension_numbers = #tpu.dot_dimension_numbers<[1], [0], [0], [1], [0, 0, 1, 1], [], []>} : vector<256x128xf32>, vector<128x128xf32>, vector<256x128xf32> -> vector<256x128xf32>
    %c128 = arith.constant 128 : index
    %c0_10 = arith.constant 0 : index
    %11 = vector.load %arg3[%c128, %c0_10] : memref<384x128xf32, #tpu.memory_space<vmem>>, vector<128x128xf32>
    %cst_11 = arith.constant dense<0.000000e+00> : vector<256x128xf32>
    %12 = tpu.matmul %6, %11, %cst_11 {dimension_numbers = #tpu.dot_dimension_numbers<[1], [0], [0], [1], [0, 0, 1, 1], [], []>} : vector<256x128xf32>, vector<128x128xf32>, vector<256x128xf32> -> vector<256x128xf32>
    %13 = arith.addf %10, %12 : vector<256x128xf32>
    %c256 = arith.constant 256 : index
    %c0_12 = arith.constant 0 : index
    %14 = vector.load %arg3[%c256, %c0_12] : memref<384x128xf32, #tpu.memory_space<vmem>>, vector<128x128xf32>
    %cst_13 = arith.constant dense<0.000000e+00> : vector<256x128xf32>
    %15 = tpu.matmul %8, %14, %cst_13 {dimension_numbers = #tpu.dot_dimension_numbers<[1], [0], [0], [1], [0, 0, 1, 1], [], []>} : vector<256x128xf32>, vector<128x128xf32>, vector<256x128xf32> -> vector<256x128xf32>
    %16 = arith.addf %13, %15 : vector<256x128xf32>
    %c0_14 = arith.constant 0 : index
    %c0_15 = arith.constant 0 : index
    %17 = vector.load %arg4[%c0_14, %c0_15] : memref<1x128xf32, #tpu.memory_space<vmem>>, vector<1x128xf32>
    %18 = vector.broadcast %17 : vector<1x128xf32> to vector<256x128xf32>
    %19 = arith.addf %16, %18 : vector<256x128xf32>
    %20 = arith.negf %19 : vector<256x128xf32>
    %21 = math.exp %20 : vector<256x128xf32>
    %cst_16 = arith.constant 1.000000e+00 : f32
    %22 = vector.broadcast %cst_16 : f32 to vector<256x128xf32>
    %23 = arith.addf %22, %21 : vector<256x128xf32>
    %24 = arith.divf %22, %23 : vector<256x128xf32>
    %c0_17 = arith.constant 0 : index
    %c0_18 = arith.constant 0 : index
    %25 = vector.load %arg5[%c0_17, %c0_18] : memref<128x128xf32, #tpu.memory_space<vmem>>, vector<128x128xf32>
    %cst_19 = arith.constant dense<0.000000e+00> : vector<256x128xf32>
    %26 = tpu.matmul %24, %25, %cst_19 {dimension_numbers = #tpu.dot_dimension_numbers<[1], [0], [0], [1], [0, 0, 1, 1], [], []>} : vector<256x128xf32>, vector<128x128xf32>, vector<256x128xf32> -> vector<256x128xf32>
    %c0_20 = arith.constant 0 : index
    %c0_21 = arith.constant 0 : index
    %27 = vector.load %arg6[%c0_20, %c0_21] : memref<1x128xf32, #tpu.memory_space<vmem>>, vector<1x128xf32>
    %28 = vector.broadcast %27 : vector<1x128xf32> to vector<256x128xf32>
    %29 = arith.addf %26, %28 : vector<256x128xf32>
    %c0_22 = arith.constant 0 : index
    %c0_23 = arith.constant 0 : index
    %30 = vector.load %arg7[%c0_22, %c0_23] : memref<256x128xf32, #tpu.memory_space<vmem>>, vector<256x128xf32>
    tpu.vector_store %arg7[%c0_22, %c0_23], %29 {strides = array<i32>} : memref<256x128xf32, #tpu.memory_space<vmem>>, vector<256x128xf32>,
    return
  }
  func.func @transform_1(%arg0: i32, %arg1: memref<1536xi32, #tpu.memory_space<smem>>) -> (i32, i32) {
    %c0_i32 = arith.constant 0 : i32
    %c0_i32_0 = arith.constant 0 : i32
    %c0_i32_1 = arith.constant 0 : i32
    return %c0_i32, %c0_i32_0 : i32, i32
  }
  func.func @transform_2(%arg0: i32, %arg1: memref<1536xi32, #tpu.memory_space<smem>>) -> (i32, i32) {
    %c0_i32 = arith.constant 0 : i32
    %c0_i32_0 = arith.constant 0 : i32
    %c0_i32_1 = arith.constant 0 : i32
    return %c0_i32, %c0_i32_0 : i32, i32
  }
  func.func @transform_3(%arg0: i32, %arg1: memref<1536xi32, #tpu.memory_space<smem>>) -> (i32, i32) {
    %c0_i32 = arith.constant 0 : i32
    %c0_i32_0 = arith.constant 0 : i32
    %c0_i32_1 = arith.constant 0 : i32
    return %c0_i32, %c0_i32_0 : i32, i32
  }
  func.func @transform_4(%arg0: i32, %arg1: memref<1536xi32, #tpu.memory_space<smem>>) -> (i32, i32) {
    %c0_i32 = arith.constant 0 : i32
    %c0_i32_0 = arith.constant 0 : i32
    %c0_i32_1 = arith.constant 0 : i32
    return %c0_i32, %c0_i32_0 : i32, i32
  }
  func.func @transform_5(%arg0: i32, %arg1: memref<1536xi32, #tpu.memory_space<smem>>) -> (i32, i32) {
    %c0_i32 = arith.constant 0 : i32
    %c0_i32_0 = arith.constant 0 : i32
    return %arg0, %c0_i32 : i32, i32
  }
}

</mosaic_0001>

<llo_original>
// kernel: tpu_custom_call.1
$region0: #{tpu_custom_call.1}
  #allocation0 [shape = 'u32[]', space=smem, size = 0x4, offset = 0x4, fixed_abs, tag = 'smem constant byte address 0x4 - core index']
  #allocation1 [shape = 'u32[144,128]{1,0:T(1,128)}', space=vmem, size = 0x12000, scoped, tag = 'internal scratch']
  #allocation2 [shape = 'f32[256,128]{1,0:T(8,128)}', space=vmem, size = 0x20000, scoped, tag = 'scratch operand']
  #allocation3 [shape = 'f32[256,128]{1,0:T(8,128)}', space=vmem, size = 0x20000, scoped, tag = 'scratch operand']
  #allocation4 [shape = 's32[2]{0}', space=sflag, size = 0x8, scoped, tag = 'scratch operand']
  #allocation5 [shape = 's32[1]{0}', space=sflag, size = 0x4, scoped, tag = 'scoped memory for tpu_custom_call.1']
  #allocation6 [shape = 'u8[6144]{0}', space=smem, size = 0x1800, scoped, tag = 'prefetched SMEM operand 0']
  #allocation13 [shape = 's32[]', space=sflag, size = 0x4, offset = 0, fixed_abs, tag = 'sflag constant byte address 0x0 - dummy sync flag']
  #allocation14 [shape = 's32[]', space=sflag, size = 0x4, offset = 0, fixed_abs, tag = 'sflag constant byte address 0x0 - dummy sync flag']
  #allocation15 [shape = 'u32[]', space=smem, size = 0x4, offset = 0x44, fixed_abs, tag = 'smem constant byte address 0x44 - assertion arg 0']
  #allocation16 [shape = 'u32[]', space=smem, size = 0x4, offset = 0x48, fixed_abs, tag = 'smem constant byte address 0x48 - assertion arg 1']
  #allocation17 [shape = 's32[]', space=sflag, size = 0x4, offset = 0, fixed_abs, tag = 'sflag constant byte address 0x0 - dummy sync flag']
  #allocation18 [shape = 's32[]', space=sflag, size = 0x4, offset = 0, fixed_abs, tag = 'sflag constant byte address 0x0 - dummy sync flag']
  %s0 = inlined_call_operand.hbm [shape: s32[1536], index: 0, kind: input, shape index: {}]
  %s1 = inlined_call_operand.hbm [shape: f32[64,128], index: 1, kind: input, shape index: {}]
  %s2 = inlined_call_operand.hbm [shape: f32[384,128], index: 2, kind: input, shape index: {}]
  %s3 = inlined_call_operand.vmem [shape: f32[1,128], index: 3, kind: input, shape index: {}]
  %s4 = inlined_call_operand.hbm [shape: f32[128,128], index: 4, kind: input, shape index: {}]
  %s5 = inlined_call_operand.vmem [shape: f32[1,128], index: 5, kind: input, shape index: {}]
  %s6 = inlined_call_operand.hbm [shape: f32[768,128], index: 6, kind: output, shape index: {}]
  %s7 = sld [smem:[#allocation0]]
  $region79: #{tpu_custom_call.1} parent=0
    _
  %s9 = ssub.s32 1, %s7
  %s10 = scalar_select 0, %s9, %s7
  %12 = dma.hbm_to_smem %s0, 192, [#allocation6], [#allocation5]
  %13 = dma.done [#allocation5], 192
  %14 = sfence
  $region1: #{tpu_custom_call.1} parent=0
    #allocation7 [shape = 'u8[196608]{0}', space=vmem, size = 0x30000, scoped, tag = 'input window, operand 2, single buffered']
    #allocation8 [shape = 's32[2]{0}', space=sflag, size = 0x8, scoped, tag = 'scoped memory for tpu_custom_call.1']
    #allocation9 [shape = 's32[2]{0}', space=sflag, size = 0x8, scoped, tag = 'scoped memory for tpu_custom_call.1']
    #allocation10 [shape = 'u8[65536]{0}', space=vmem, size = 0x10000, scoped, tag = 'input window, operand 4, single buffered']
    #allocation11 [shape = 's32[1]{0}', space=sflag, size = 0x4, scoped, tag = 'scoped memory for tpu_custom_call.1']
    #allocation12 [shape = 'u8[262144]{0}', space=vmem, size = 0x40000, scoped, tag = 'output window, operand 0']
    %15 = vsyncpa [#allocation8], 0
    %16 = vsyncpa [#allocation11], 0
    %17 = vsyncpa [#allocation9], 0
    %s18 = scalar_lea.sflag [#allocation9], 1
    %19 = vsyncpa %s18, 0
    loop: start=0, step=1, limit=5
    $region2: #{tpu_custom_call.1} parent=1 // loop_pre_header
      _
    $region3: #{tpu_custom_call.1} parent=1 // loop_header
      %s21 = sphi 0, %s25
      %p22 = scmp.ge.s32.totalorder %s21, 5
      %s29 = sphi 0, %s29
      %s31 = sphi 0, %s29
      %s32 = sphi 0, %s31
      %s46 = sphi 0, %s32
      %s50 = sphi 0, %s50
      %s52 = sphi 0, %s50
      %s53 = sphi 0, %s52
      %s67 = sphi 0, %s53
      %s71 = sphi 0, %s71
      %s73 = sphi 0, %s71
      %s74 = sphi 0, %s73
      %s88 = sphi 0, %s74
      %s92 = sphi 0, %s92
      %s94 = sphi 0, %s92
      %s95 = sphi 0, %s94
      %s109 = sphi 0, %s95
      %s115 = sphi 0, %s117
      %s118 = sphi 0, %s115
      %s119 = sphi 0, %s118
      %s135 = sphi 0, %s119
    $region4: #{tpu_custom_call.1} parent=1 // loop_header_branch
      %24 = sbr.rel (%p22) target = $region8
    $region5: #{tpu_custom_call.1} parent=1 // loop_body
      %s26 = ssub.s32 %s21, 1
      %s27 = ssub.s32 %s21, 2
      %s28 = sadd.s32 %s21, 1
      %s30 = sadd.s32 %s29, 1
      %p33 = scmp.eq.s32.totalorder %s21, 2
      %p34 = scmp.ne.s32.totalorder %s29, %s31
      %p35 = scmp.eq.s32.totalorder %s21, 0
      %p36 = por %p34, %p35
      %p37 = scmp.ne.s32.totalorder %s29, %s31
      %p38 = scmp.eq.s32.totalorder %s26, 2
      %p39 = por %p37, %p38
      %p40 = scmp.ne.s32.totalorder %s31, %s32
      %p41 = scmp.eq.s32.totalorder %s26, 0
      %p42 = por %p40, %p41
      %p43 = scmp.ne.s32.totalorder %s31, %s32
      %p44 = scmp.eq.s32.totalorder %s27, 2
      %p45 = por %p43, %p44
      %p47 = scmp.ne.s32.totalorder %s32, %s46
      %p48 = scmp.eq.s32.totalorder %s27, 0
      %p49 = por %p47, %p48
      %s51 = sadd.s32 %s50, 1
      %p54 = scmp.eq.s32.totalorder %s21, 2
      %p55 = scmp.ne.s32.totalorder %s50, %s52
      %p56 = scmp.eq.s32.totalorder %s21, 0
      %p57 = por %p55, %p56
      %p58 = scmp.ne.s32.totalorder %s50, %s52
      %p59 = scmp.eq.s32.totalorder %s26, 2
      %p60 = por %p58, %p59
      %p61 = scmp.ne.s32.totalorder %s52, %s53
      %p62 = scmp.eq.s32.totalorder %s26, 0
      %p63 = por %p61, %p62
      %p64 = scmp.ne.s32.totalorder %s52, %s53
      %p65 = scmp.eq.s32.totalorder %s27, 2
      %p66 = por %p64, %p65
      %p68 = scmp.ne.s32.totalorder %s53, %s67
      %p69 = scmp.eq.s32.totalorder %s27, 0
      %p70 = por %p68, %p69
      %s72 = sadd.s32 %s71, 1
      %p75 = scmp.eq.s32.totalorder %s21, 2
      %p76 = scmp.ne.s32.totalorder %s71, %s73
      %p77 = scmp.eq.s32.totalorder %s21, 0
      %p78 = por %p76, %p77
      %p79 = scmp.ne.s32.totalorder %s71, %s73
      %p80 = scmp.eq.s32.totalorder %s26, 2
      %p81 = por %p79, %p80
      %p82 = scmp.ne.s32.totalorder %s73, %s74
      %p83 = scmp.eq.s32.totalorder %s26, 0
      %p84 = por %p82, %p83
      %p85 = scmp.ne.s32.totalorder %s73, %s74
      %p86 = scmp.eq.s32.totalorder %s27, 2
      %p87 = por %p85, %p86
      %p89 = scmp.ne.s32.totalorder %s74, %s88
      %p90 = scmp.eq.s32.totalorder %s27, 0
      %p91 = por %p89, %p90
      %s93 = sadd.s32 %s92, 1
      %p96 = scmp.eq.s32.totalorder %s21, 2
      %p97 = scmp.ne.s32.totalorder %s92, %s94
      %p98 = scmp.eq.s32.totalorder %s21, 0
      %p99 = por %p97, %p98
      %p100 = scmp.ne.s32.totalorder %s92, %s94
      %p101 = scmp.eq.s32.totalorder %s26, 2
      %p102 = por %p100, %p101
      %p103 = scmp.ne.s32.totalorder %s94, %s95
      %p104 = scmp.eq.s32.totalorder %s26, 0
      %p105 = por %p103, %p104
      %p106 = scmp.ne.s32.totalorder %s94, %s95
      %p107 = scmp.eq.s32.totalorder %s27, 2
      %p108 = por %p106, %p107
      %p110 = scmp.ne.s32.totalorder %s95, %s109
      %p111 = scmp.eq.s32.totalorder %s27, 0
      %p112 = por %p110, %p111
      %s113 = ssub.s32 %s21, %s28
      %p114 = scmp.eq.s32.totalorder %s113, 0
      %s116 = sadd.s32 %s115, 1
      %s117 = scalar_select %p114, %s115, %s116
      %p120 = pneg %p114
      %p121 = scmp.eq.s32.totalorder %s21, 2
      %p122 = por %p120, %p121
      %p123 = scmp.ne.s32.totalorder %s115, %s118
      %p124 = scmp.eq.s32.totalorder %s21, 0
      %p125 = por %p123, %p124
      %p126 = scmp.ne.s32.totalorder %s115, %s118
      %p127 = scmp.eq.s32.totalorder %s26, 2
      %p128 = por %p126, %p127
      %p129 = scmp.ne.s32.totalorder %s118, %s119
      %p130 = scmp.eq.s32.totalorder %s26, 0
      %p131 = por %p129, %p130
      %p132 = scmp.ne.s32.totalorder %s118, %s119
      %p133 = scmp.eq.s32.totalorder %s27, 2
      %p134 = por %p132, %p133
      %p136 = scmp.ne.s32.totalorder %s119, %s135
      %p137 = scmp.eq.s32.totalorder %s27, 0
      %p138 = por %p136, %p137
      %p139 = scmp.le.s32.totalorder 1, %s21
      %p140 = scmp.lt.s32.totalorder %s21, 4
      %p141 = pnand %p139, %p140
      %p142 = pneg %p141
      // Predicated region
      $region9: #{tpu_custom_call.1} parent=5 // pred_check
        _
      $region10: #{tpu_custom_call.1} parent=5 // pred_check_branch
        %144 = sbr.rel (%p141) target = $region12
      $region11: #{tpu_custom_call.1} parent=5 // pred_region
        %s145 = ssub.s32 %s21, 1
        // Predicated region
        $region13: #{tpu_custom_call.1} parent=11 // pred_check
          %p146 = pneg %p42
        $region14: #{tpu_custom_call.1} parent=11 // pred_check_branch
          %148 = sbr.rel (%p146) target = $region16
        $region15: #{tpu_custom_call.1} parent=11 // pred_region
          %s150 = ssub.s32 6144, 6144
          %151 = vsyncadd [#allocation8], %s150
          %s152 = sshll.u32 [#allocation7], 4
          %s153 = int_to_ptr.vmem [resolvable:$true] %s152
          %158 = dma.hbm_to_vmem [thread:$0]  %s2, 6144, %s153, [#allocation8], 128, 128, 8
        $region16: #{tpu_custom_call.1} parent=11 // pred_fallthru
          _
        // Predicated region
        $region17: #{tpu_custom_call.1} parent=11 // pred_check
          %p159 = pneg %p63
        $region18: #{tpu_custom_call.1} parent=11 // pred_check_branch
          %161 = sbr.rel (%p159) target = $region20
        $region19: #{tpu_custom_call.1} parent=11 // pred_region
          _
        $region20: #{tpu_custom_call.1} parent=11 // pred_fallthru
          _
        // Predicated region
        $region21: #{tpu_custom_call.1} parent=11 // pred_check
          %p162 = pneg %p84
        $region22: #{tpu_custom_call.1} parent=11 // pred_check_branch
          %164 = sbr.rel (%p162) target = $region24
        $region23: #{tpu_custom_call.1} parent=11 // pred_region
          %s166 = ssub.s32 2048, 2048
          %167 = vsyncadd [#allocation11], %s166
          %s168 = sshll.u32 [#allocation10], 4
          %s169 = int_to_ptr.vmem [resolvable:$true] %s168
          %174 = dma.hbm_to_vmem [thread:$0]  %s4, 2048, %s169, [#allocation11], 128, 128, 8
        $region24: #{tpu_custom_call.1} parent=11 // pred_fallthru
          _
        // Predicated region
        $region25: #{tpu_custom_call.1} parent=11 // pred_check
          %p175 = pneg %p105
        $region26: #{tpu_custom_call.1} parent=11 // pred_check_branch
          %177 = sbr.rel (%p175) target = $region28
        $region27: #{tpu_custom_call.1} parent=11 // pred_region
          _
        $region28: #{tpu_custom_call.1} parent=11 // pred_fallthru
          _
      $region12: #{tpu_custom_call.1} parent=5 // pred_fallthru
        _
      %p178 = scmp.lt.s32.totalorder %s21, 3
      // Predicated region
      $region29: #{tpu_custom_call.1} parent=5 // pred_check
        %p179 = pneg %p178
      $region30: #{tpu_custom_call.1} parent=5 // pred_check_branch
        %181 = sbr.rel (%p179) target = $region32
      $region31: #{tpu_custom_call.1} parent=5 // pred_region
        _
      $region32: #{tpu_custom_call.1} parent=5 // pred_fallthru
        _
      %p182 = scmp.le.s32.totalorder 1, %s21
      %p183 = scmp.lt.s32.totalorder %s21, 4
      %p184 = pnand %p182, %p183
      %p185 = pneg %p184
      // Predicated region
      $region33: #{tpu_custom_call.1} parent=5 // pred_check
        _
      $region34: #{tpu_custom_call.1} parent=5 // pred_check_branch
        %187 = sbr.rel (%p184) target = $region36
      $region35: #{tpu_custom_call.1} parent=5 // pred_region
        %s188 = ssub.s32 %s21, 1
        // Predicated region
        $region37: #{tpu_custom_call.1} parent=35 // pred_check
          %p189 = pneg %p42
        $region38: #{tpu_custom_call.1} parent=35 // pred_check_branch
          %191 = sbr.rel (%p189) target = $region40
        $region39: #{tpu_custom_call.1} parent=35 // pred_region
          %192 = dma.done [#allocation8], 6144
        $region40: #{tpu_custom_call.1} parent=35 // pred_fallthru
          _
        // Predicated region
        $region41: #{tpu_custom_call.1} parent=35 // pred_check
          %p193 = pneg %p84
        $region42: #{tpu_custom_call.1} parent=35 // pred_check_branch
          %195 = sbr.rel (%p193) target = $region44
        $region43: #{tpu_custom_call.1} parent=35 // pred_region
          %196 = dma.done [#allocation11], 2048
        $region44: #{tpu_custom_call.1} parent=35 // pred_fallthru
          _
        %p197 = pneg %p42
        %p198 = pneg %p39
        %p199 = pneg %p63
        %p200 = pneg %p60
        %p201 = pneg %p84
        %p202 = pneg %p81
        %p203 = pneg %p105
        %p204 = pneg %p102
        %p205 = pneg %p131
        %p206 = pneg %p128
        %s207 = sand.u32 %s118, 1
        %s208 = scalar_lea.sflag [#allocation9], %s207
        %s209 = sand.u32 %s118, 1
        %s210 = smul.addr %s209, 256
        %s211 = scalar_lea.vmem [#allocation12], %s210
        %s212 = smul.u32 32, %s26
        %s213 = smul.u32 %s26, 256
        loop: start=0, step=1, limit=256
        $region45: #{tpu_custom_call.1} parent=35 // loop_pre_header
          _
        $region46: #{tpu_custom_call.1} parent=35 // loop_header
          %s215 = sphi 0, %s219
          %p216 = scmp.ge.s32.totalorder %s215, 256
        $region47: #{tpu_custom_call.1} parent=35 // loop_header_branch
          %218 = sbr.rel (%p216) target = $region51
        $region48: #{tpu_custom_call.1} parent=35 // loop_body
          %s220 = sadd.s32 %s213, %s215
          %s221 = smul.u32 %s220, 2
          %s222 = sld [smem:[#allocation6 + %s221]]
          %s223 = sadd.s32 %s221, 1
          %s224 = sld [smem:[#allocation6 + %s223]]
          %s225 = smul.addr %s222, 16
          %s226 = scalar_lea.hbm %s1, %s225
          %s227 = scalar_lea.vmem [#allocation2], %s215
          // Predicated region
          $region52: #{tpu_custom_call.1} parent=48 // pred_check
            _
          $region53: #{tpu_custom_call.1} parent=48 // pred_check_branch
            %229 = sbr.rel target = $region55
          $region54: #{tpu_custom_call.1} parent=48 // pred_region
            %230 = sst [smem:[#allocation15]] [#allocation14]
            %231 = sst [smem:[#allocation16]] [#allocation13]
          $region55: #{tpu_custom_call.1} parent=48 // pred_fallthru
            _
          %233 = shalt.err (0)
          %s235 = sshll.u32 %s227, 4
          %s236 = int_to_ptr.vmem [resolvable:$true] %s235
          %238 = dma.hbm_to_vmem [thread:$0]  %s226, 16, %s236, [#allocation4]
          %s239 = smul.addr %s224, 16
          %s240 = scalar_lea.hbm %s1, %s239
          %s241 = scalar_lea.vmem [#allocation3], %s215
          %s242 = scalar_lea.sflag [#allocation4], 1
          // Predicated region
          $region56: #{tpu_custom_call.1} parent=48 // pred_check
            _
          $region57: #{tpu_custom_call.1} parent=48 // pred_check_branch
            %244 = sbr.rel target = $region59
          $region58: #{tpu_custom_call.1} parent=48 // pred_region
            %245 = sst [smem:[#allocation15]] [#allocation18]
            %246 = sst [smem:[#allocation16]] [#allocation17]
          $region59: #{tpu_custom_call.1} parent=48 // pred_fallthru
            _
          %248 = shalt.err (0)
          %s250 = sshll.u32 %s241, 4
          %s251 = int_to_ptr.vmem [resolvable:$true] %s250
          %253 = dma.hbm_to_vmem [thread:$0]  %s240, 16, %s251, %s242
        $region49: #{tpu_custom_call.1} parent=35 // loop_footer
          %s219 = sadd.s32 1, %s215
        $region50: #{tpu_custom_call.1} parent=35 // loop_footer_branch
          %214 = sbr.rel target = $region46
        $region51: #{tpu_custom_call.1} parent=35 // loop_exit
          _
        loop: start=0, step=1, limit=256
        $region60: #{tpu_custom_call.1} parent=35 // loop_pre_header
          _
        $region61: #{tpu_custom_call.1} parent=35 // loop_header
          %s255 = sphi 0, %s259
          %p256 = scmp.ge.s32.totalorder %s255, 256
        $region62: #{tpu_custom_call.1} parent=35 // loop_header_branch
          %258 = sbr.rel (%p256) target = $region66
        $region63: #{tpu_custom_call.1} parent=35 // loop_body
          %261 = dma.done [#allocation4], 16
          %s262 = scalar_lea.sflag [#allocation4], 1
          %264 = dma.done %s262, 16
        $region64: #{tpu_custom_call.1} parent=35 // loop_footer
          %s259 = sadd.s32 1, %s255
        $region65: #{tpu_custom_call.1} parent=35 // loop_footer_branch
          %254 = sbr.rel target = $region61
        $region66: #{tpu_custom_call.1} parent=35 // loop_exit
          _
        %v265 = vld [vmem:[#allocation2] sm:$0xff]
        %v266 = vld [vmem:[#allocation2 + $0x8] sm:$0xff]
        %v267 = vld [vmem:[#allocation2 + $0x10] sm:$0xff]
        %v268 = vld [vmem:[#allocation2 + $0x18] sm:$0xff]
        %v269 = vld [vmem:[#allocation2 + $0x20] sm:$0xff]
        %v270 = vld [vmem:[#allocation2 + $0x28] sm:$0xff]
        %v271 = vld [vmem:[#allocation2 + $0x30] sm:$0xff]
        %v272 = vld [vmem:[#allocation2 + $0x38] sm:$0xff]
        %v273 = vld [vmem:[#allocation2 + $0x40] sm:$0xff]
        %v274 = vld [vmem:[#allocation2 + $0x48] sm:$0xff]
        %v275 = vld [vmem:[#allocation2 + $0x50] sm:$0xff]
        %v276 = vld [vmem:[#allocation2 + $0x58] sm:$0xff]
        %v277 = vld [vmem:[#allocation2 + $0x60] sm:$0xff]
        %v278 = vld [vmem:[#allocation2 + $0x68] sm:$0xff]
        %v279 = vld [vmem:[#allocation2 + $0x70] sm:$0xff]
        %v280 = vld [vmem:[#allocation2 + $0x78] sm:$0xff]
        %v281 = vld [vmem:[#allocation2 + $0x80] sm:$0xff]
        %v282 = vld [vmem:[#allocation2 + $0x88] sm:$0xff]
        %v283 = vld [vmem:[#allocation2 + $0x90] sm:$0xff]
        %v284 = vld [vmem:[#allocation2 + $0x98] sm:$0xff]
        %v285 = vld [vmem:[#allocation2 + $0xa0] sm:$0xff]
        %v286 = vld [vmem:[#allocation2 + $0xa8] sm:$0xff]
        %v287 = vld [vmem:[#allocation2 + $0xb0] sm:$0xff]
        %v288 = vld [vmem:[#allocation2 + $0xb8] sm:$0xff]
        %v289 = vld [vmem:[#allocation2 + $0xc0] sm:$0xff]
        %v290 = vld [vmem:[#allocation2 + $0xc8] sm:$0xff]
        %v291 = vld [vmem:[#allocation2 + $0xd0] sm:$0xff]
        %v292 = vld [vmem:[#allocation2 + $0xd8] sm:$0xff]
        %v293 = vld [vmem:[#allocation2 + $0xe0] sm:$0xff]
        %v294 = vld [vmem:[#allocation2 + $0xe8] sm:$0xff]
        %v295 = vld [vmem:[#allocation2 + $0xf0] sm:$0xff]
        %v296 = vld [vmem:[#allocation2 + $0xf8] sm:$0xff]
        %v297 = vld [vmem:[#allocation3] sm:$0xff]
        %v298 = vld [vmem:[#allocation3 + $0x8] sm:$0xff]
        %v299 = vld [vmem:[#allocation3 + $0x10] sm:$0xff]
        %v300 = vld [vmem:[#allocation3 + $0x18] sm:$0xff]
        %v301 = vld [vmem:[#allocation3 + $0x20] sm:$0xff]
        %v302 = vld [vmem:[#allocation3 + $0x28] sm:$0xff]
        %v303 = vld [vmem:[#allocation3 + $0x30] sm:$0xff]
        %v304 = vld [vmem:[#allocation3 + $0x38] sm:$0xff]
        %v305 = vld [vmem:[#allocation3 + $0x40] sm:$0xff]
        %v306 = vld [vmem:[#allocation3 + $0x48] sm:$0xff]
        %v307 = vld [vmem:[#allocation3 + $0x50] sm:$0xff]
        %v308 = vld [vmem:[#allocation3 + $0x58] sm:$0xff]
        %v309 = vld [vmem:[#allocation3 + $0x60] sm:$0xff]
        %v310 = vld [vmem:[#allocation3 + $0x68] sm:$0xff]
        %v311 = vld [vmem:[#allocation3 + $0x70] sm:$0xff]
        %v312 = vld [vmem:[#allocation3 + $0x78] sm:$0xff]
        %v313 = vld [vmem:[#allocation3 + $0x80] sm:$0xff]
        %v314 = vld [vmem:[#allocation3 + $0x88] sm:$0xff]
        %v315 = vld [vmem:[#allocation3 + $0x90] sm:$0xff]
        %v316 = vld [vmem:[#allocation3 + $0x98] sm:$0xff]
        %v317 = vld [vmem:[#allocation3 + $0xa0] sm:$0xff]
        %v318 = vld [vmem:[#allocation3 + $0xa8] sm:$0xff]
        %v319 = vld [vmem:[#allocation3 + $0xb0] sm:$0xff]
        %v320 = vld [vmem:[#allocation3 + $0xb8] sm:$0xff]
        %v321 = vld [vmem:[#allocation3 + $0xc0] sm:$0xff]
        %v322 = vld [vmem:[#allocation3 + $0xc8] sm:$0xff]
        %v323 = vld [vmem:[#allocation3 + $0xd0] sm:$0xff]
        %v324 = vld [vmem:[#allocation3 + $0xd8] sm:$0xff]
        %v325 = vld [vmem:[#allocation3 + $0xe0] sm:$0xff]
        %v326 = vld [vmem:[#allocation3 + $0xe8] sm:$0xff]
        %v327 = vld [vmem:[#allocation3 + $0xf0] sm:$0xff]
        %v328 = vld [vmem:[#allocation3 + $0xf8] sm:$0xff]
        %v329 = vadd.f32 %v265, %v297
        %v330 = vadd.f32 %v266, %v298
        %v331 = vadd.f32 %v267, %v299
        %v332 = vadd.f32 %v268, %v300
        %v333 = vadd.f32 %v269, %v301
        %v334 = vadd.f32 %v270, %v302
        %v335 = vadd.f32 %v271, %v303
        %v336 = vadd.f32 %v272, %v304
        %v337 = vadd.f32 %v273, %v305
        %v338 = vadd.f32 %v274, %v306
        %v339 = vadd.f32 %v275, %v307
        %v340 = vadd.f32 %v276, %v308
        %v341 = vadd.f32 %v277, %v309
        %v342 = vadd.f32 %v278, %v310
        %v343 = vadd.f32 %v279, %v311
        %v344 = vadd.f32 %v280, %v312
        %v345 = vadd.f32 %v281, %v313
        %v346 = vadd.f32 %v282, %v314
        %v347 = vadd.f32 %v283, %v315
        %v348 = vadd.f32 %v284, %v316
        %v349 = vadd.f32 %v285, %v317
        %v350 = vadd.f32 %v286, %v318
        %v351 = vadd.f32 %v287, %v319
        %v352 = vadd.f32 %v288, %v320
        %v353 = vadd.f32 %v289, %v321
        %v354 = vadd.f32 %v290, %v322
        %v355 = vadd.f32 %v291, %v323
        %v356 = vadd.f32 %v292, %v324
        %v357 = vadd.f32 %v293, %v325
        %v358 = vadd.f32 %v294, %v326
        %v359 = vadd.f32 %v295, %v327
        %v360 = vadd.f32 %v296, %v328
        %v361 = vmul.f32 %v265, %v297
        %v362 = vmul.f32 %v266, %v298
        %v363 = vmul.f32 %v267, %v299
        %v364 = vmul.f32 %v268, %v300
        %v365 = vmul.f32 %v269, %v301
        %v366 = vmul.f32 %v270, %v302
        %v367 = vmul.f32 %v271, %v303
        %v368 = vmul.f32 %v272, %v304
        %v369 = vmul.f32 %v273, %v305
        %v370 = vmul.f32 %v274, %v306
        %v371 = vmul.f32 %v275, %v307
        %v372 = vmul.f32 %v276, %v308
        %v373 = vmul.f32 %v277, %v309
        %v374 = vmul.f32 %v278, %v310
        %v375 = vmul.f32 %v279, %v311
        %v376 = vmul.f32 %v280, %v312
        %v377 = vmul.f32 %v281, %v313
        %v378 = vmul.f32 %v282, %v314
        %v379 = vmul.f32 %v283, %v315
        %v380 = vmul.f32 %v284, %v316
        %v381 = vmul.f32 %v285, %v317
        %v382 = vmul.f32 %v286, %v318
        %v383 = vmul.f32 %v287, %v319
        %v384 = vmul.f32 %v288, %v320
        %v385 = vmul.f32 %v289, %v321
        %v386 = vmul.f32 %v290, %v322
        %v387 = vmul.f32 %v291, %v323
        %v388 = vmul.f32 %v292, %v324
        %v389 = vmul.f32 %v293, %v325
        %v390 = vmul.f32 %v294, %v326
        %v391 = vmul.f32 %v295, %v327
        %v392 = vmul.f32 %v296, %v328
        %v393 = vsub.f32 %v265, %v297
        %v394 = vsub.f32 %v266, %v298
        %v395 = vsub.f32 %v267, %v299
        %v396 = vsub.f32 %v268, %v300
        %v397 = vsub.f32 %v269, %v301
        %v398 = vsub.f32 %v270, %v302
        %v399 = vsub.f32 %v271, %v303
        %v400 = vsub.f32 %v272, %v304
        %v401 = vsub.f32 %v273, %v305
        %v402 = vsub.f32 %v274, %v306
        %v403 = vsub.f32 %v275, %v307
        %v404 = vsub.f32 %v276, %v308
        %v405 = vsub.f32 %v277, %v309
        %v406 = vsub.f32 %v278, %v310
        %v407 = vsub.f32 %v279, %v311
        %v408 = vsub.f32 %v280, %v312
        %v409 = vsub.f32 %v281, %v313
        %v410 = vsub.f32 %v282, %v314
        %v411 = vsub.f32 %v283, %v315
        %v412 = vsub.f32 %v284, %v316
        %v413 = vsub.f32 %v285, %v317
        %v414 = vsub.f32 %v286, %v318
        %v415 = vsub.f32 %v287, %v319
        %v416 = vsub.f32 %v288, %v320
        %v417 = vsub.f32 %v289, %v321
        %v418 = vsub.f32 %v290, %v322
        %v419 = vsub.f32 %v291, %v323
        %v420 = vsub.f32 %v292, %v324
        %v421 = vsub.f32 %v293, %v325
        %v422 = vsub.f32 %v294, %v326
        %v423 = vsub.f32 %v295, %v327
        %v424 = vsub.f32 %v296, %v328
        %v425 = vand.u32 2147483647, %v393
        %v426 = vand.u32 2147483647, %v394
        %v427 = vand.u32 2147483647, %v395
        %v428 = vand.u32 2147483647, %v396
        %v429 = vand.u32 2147483647, %v397
        %v430 = vand.u32 2147483647, %v398
        %v431 = vand.u32 2147483647, %v399
        %v432 = vand.u32 2147483647, %v400
        %v433 = vand.u32 2147483647, %v401
        %v434 = vand.u32 2147483647, %v402
        %v435 = vand.u32 2147483647, %v403
        %v436 = vand.u32 2147483647, %v404
        %v437 = vand.u32 2147483647, %v405
        %v438 = vand.u32 2147483647, %v406
        %v439 = vand.u32 2147483647, %v407
        %v440 = vand.u32 2147483647, %v408
        %v441 = vand.u32 2147483647, %v409
        %v442 = vand.u32 2147483647, %v410
        %v443 = vand.u32 2147483647, %v411
        %v444 = vand.u32 2147483647, %v412
        %v445 = vand.u32 2147483647, %v413
        %v446 = vand.u32 2147483647, %v414
        %v447 = vand.u32 2147483647, %v415
        %v448 = vand.u32 2147483647, %v416
        %v449 = vand.u32 2147483647, %v417
        %v450 = vand.u32 2147483647, %v418
        %v451 = vand.u32 2147483647, %v419
        %v452 = vand.u32 2147483647, %v420
        %v453 = vand.u32 2147483647, %v421
        %v454 = vand.u32 2147483647, %v422
        %v455 = vand.u32 2147483647, %v423
        %v456 = vand.u32 2147483647, %v424
        %v457 = vld [vmem:[#allocation7] sm:$0xff]
        %v458 = vld [vmem:[#allocation7 + $0x8] sm:$0xff]
        %v459 = vld [vmem:[#allocation7 + $0x10] sm:$0xff]
        %v460 = vld [vmem:[#allocation7 + $0x18] sm:$0xff]
        %v461 = vld [vmem:[#allocation7 + $0x20] sm:$0xff]
        %v462 = vld [vmem:[#allocation7 + $0x28] sm:$0xff]
        %v463 = vld [vmem:[#allocation7 + $0x30] sm:$0xff]
        %v464 = vld [vmem:[#allocation7 + $0x38] sm:$0xff]
        %v465 = vld [vmem:[#allocation7 + $0x40] sm:$0xff]
        %v466 = vld [vmem:[#allocation7 + $0x48] sm:$0xff]
        %v467 = vld [vmem:[#allocation7 + $0x50] sm:$0xff]
        %v468 = vld [vmem:[#allocation7 + $0x58] sm:$0xff]
        %v469 = vld [vmem:[#allocation7 + $0x60] sm:$0xff]
        %v470 = vld [vmem:[#allocation7 + $0x68] sm:$0xff]
        %v471 = vld [vmem:[#allocation7 + $0x70] sm:$0xff]
        %v472 = vld [vmem:[#allocation7 + $0x78] sm:$0xff]
        %v473 = vld [vmem:[#allocation7 + $0x80] sm:$0xff]
        %v474 = vld [vmem:[#allocation7 + $0x88] sm:$0xff]
        %v475 = vld [vmem:[#allocation7 + $0x90] sm:$0xff]
        %v476 = vld [vmem:[#allocation7 + $0x98] sm:$0xff]
        %v477 = vld [vmem:[#allocation7 + $0xa0] sm:$0xff]
        %v478 = vld [vmem:[#allocation7 + $0xa8] sm:$0xff]
        %v479 = vld [vmem:[#allocation7 + $0xb0] sm:$0xff]
        %v480 = vld [vmem:[#allocation7 + $0xb8] sm:$0xff]
        %v481 = vld [vmem:[#allocation7 + $0xc0] sm:$0xff]
        %v482 = vld [vmem:[#allocation7 + $0xc8] sm:$0xff]
        %v483 = vld [vmem:[#allocation7 + $0xd0] sm:$0xff]
        %v484 = vld [vmem:[#allocation7 + $0xd8] sm:$0xff]
        %v485 = vld [vmem:[#allocation7 + $0xe0] sm:$0xff]
        %v486 = vld [vmem:[#allocation7 + $0xe8] sm:$0xff]
        %v487 = vld [vmem:[#allocation7 + $0xf0] sm:$0xff]
        %v488 = vld [vmem:[#allocation7 + $0xf8] sm:$0xff]
        %489 = vmatprep.subr.mxu0 0.0
        %490 = vmatpush1.msra.mxu0 %v473
        %491 = vmatprep.subr.mxu0 0.0
        %492 = vmatpush1.msra.mxu0 %v474
        %493 = vmatprep.subr.mxu0 0.0
        %494 = vmatpush1.msra.mxu0 %v475
        %495 = vmatprep.subr.mxu0 0.0
        %496 = vmatpush1.msra.mxu0 %v476
        %497 = vmatprep.subr.mxu0 0.0
        %498 = vmatpush1.msra.mxu0 %v477
        %499 = vmatprep.subr.mxu0 0.0
        %500 = vmatpush1.msra.mxu0 %v478
        %501 = vmatprep.subr.mxu0 0.0
        %502 = vmatpush1.msra.mxu0 %v479
        %503 = vmatprep.subr.mxu0 0.0
        %504 = vmatpush1.msra.mxu0 %v480
        %505 = vmatprep.subr.mxu0 0.0
        %506 = vmatpush1.msra.mxu0 %v481
        %507 = vmatprep.subr.mxu0 0.0
        %508 = vmatpush1.msra.mxu0 %v482
        %509 = vmatprep.subr.mxu0 0.0
        %510 = vmatpush1.msra.mxu0 %v483
        %511 = vmatprep.subr.mxu0 0.0
        %512 = vmatpush1.msra.mxu0 %v484
        %513 = vmatprep.subr.mxu0 0.0
        %514 = vmatpush1.msra.mxu0 %v485
        %515 = vmatprep.subr.mxu0 0.0
        %516 = vmatpush1.msra.mxu0 %v486
        %517 = vmatprep.subr.mxu0 0.0
        %518 = vmatpush1.msra.mxu0 %v487
        %519 = vmatprep.subr.mxu0 0.0
        %520 = vmatpush1.msra.mxu0 %v488
        %521 = vmatprep.subr.mxu0 0.0
        %522 = vmatpush1.msra.mxu0 0.0
        %523 = vmatprep.subr.mxu0 0.0
        %524 = vmatpush1.msra.mxu0 0.0
        %525 = vmatprep.subr.mxu0 0.0
        %526 = vmatpush1.msra.mxu0 0.0
        %527 = vmatprep.subr.mxu0 0.0
        %528 = vmatpush1.msra.mxu0 0.0
        %529 = vmatprep.subr.mxu0 0.0
        %530 = vmatpush1.msra.mxu0 0.0
        %531 = vmatprep.subr.mxu0 0.0
        %532 = vmatpush1.msra.mxu0 0.0
        %533 = vmatprep.subr.mxu0 0.0
        %534 = vmatpush1.msra.mxu0 0.0
        %535 = vmatprep.subr.mxu0 0.0
        %536 = vmatpush1.msra.mxu0 0.0
        %537 = vmatprep.subr.mxu0 0.0
        %538 = vmatpush1.msra.mxu0 0.0
        %539 = vmatprep.subr.mxu0 0.0
        %540 = vmatpush1.msra.mxu0 0.0
        %541 = vmatprep.subr.mxu0 0.0
        %542 = vmatpush1.msra.mxu0 0.0
        %543 = vmatprep.subr.mxu0 0.0
        %544 = vmatpush1.msra.mxu0 0.0
        %545 = vmatprep.subr.mxu0 0.0
        %546 = vmatpush1.msra.mxu0 0.0
        %547 = vmatprep.subr.mxu0 0.0
        %548 = vmatpush1.msra.mxu0 0.0
        %549 = vmatprep.subr.mxu0 0.0
        %550 = vmatpush1.msra.mxu0 0.0
        %551 = vmatprep.subr.mxu0 0.0
        %552 = vmatpush1.msra.mxu0 0.0
        %553 = vmatprep.mubr.f32.mxu0 0.0
        %554 = vmatmul.mubr.f32.gmra.mrb[0].mxu0 %v361
        %v555 = vpop.f32.mrb[0].mxu0
        %v556 = vadd.f32 0.0, %v555
        %v557 = vpop.f32.mrb[0].mxu0
        %558 = vmatprep.mubr.f32.mxu0 0.0
        %559 = vmatmul.mubr.f32.gmra.mrb[0].mxu0 %v362
        %v560 = vpop.f32.mrb[0].mxu0
        %v561 = vadd.f32 0.0, %v560
        %v562 = vpop.f32.mrb[0].mxu0
        %563 = vmatprep.mubr.f32.mxu0 0.0
        %564 = vmatmul.mubr.f32.gmra.mrb[0].mxu0 %v363
        %v565 = vpop.f32.mrb[0].mxu0
        %v566 = vadd.f32 0.0, %v565
        %v567 = vpop.f32.mrb[0].mxu0
        %568 = vmatprep.mubr.f32.mxu0 0.0
        %569 = vmatmul.mubr.f32.gmra.mrb[0].mxu0 %v364
        %v570 = vpop.f32.mrb[0].mxu0
        %v571 = vadd.f32 0.0, %v570
        %v572 = vpop.f32.mrb[0].mxu0
        %573 = vmatprep.mubr.f32.mxu0 0.0
        %574 = vmatmul.mubr.f32.gmra.mrb[0].mxu0 %v365
        %v575 = vpop.f32.mrb[0].mxu0
        %v576 = vadd.f32 0.0, %v575
        %v577 = vpop.f32.mrb[0].mxu0
        %578 = vmatprep.mubr.f32.mxu0 0.0
        %579 = vmatmul.mubr.f32.gmra.mrb[0].mxu0 %v366
        %v580 = vpop.f32.mrb[0].mxu0
        %v581 = vadd.f32 0.0, %v580
        %v582 = vpop.f32.mrb[0].mxu0
        %583 = vmatprep.mubr.f32.mxu0 0.0
        %584 = vmatmul.mubr.f32.gmra.mrb[0].mxu0 %v367
        %v585 = vpop.f32.mrb[0].mxu0
        %v586 = vadd.f32 0.0, %v585
        %v587 = vpop.f32.mrb[0].mxu0
        %588 = vmatprep.mubr.f32.mxu0 0.0
        %589 = vmatmul.mubr.f32.gmra.mrb[0].mxu0 %v368
        %v590 = vpop.f32.mrb[0].mxu0
        %v591 = vadd.f32 0.0, %v590
        %v592 = vpop.f32.mrb[0].mxu0
        %593 = vmatprep.mubr.f32.mxu0 0.0
        %594 = vmatmul.mubr.f32.gmra.mrb[0].mxu0 %v369
        %v595 = vpop.f32.mrb[0].mxu0
        %v596 = vadd.f32 0.0, %v595
        %v597 = vpop.f32.mrb[0].mxu0
        %598 = vmatprep.mubr.f32.mxu0 0.0
        %599 = vmatmul.mubr.f32.gmra.mrb[0].mxu0 %v370
        %v600 = vpop.f32.mrb[0].mxu0
        %v601 = vadd.f32 0.0, %v600
        %v602 = vpop.f32.mrb[0].mxu0
        %603 = vmatprep.mubr.f32.mxu0 0.0
        %604 = vmatmul.mubr.f32.gmra.mrb[0].mxu0 %v371
        %v605 = vpop.f32.mrb[0].mxu0
        %v606 = vadd.f32 0.0, %v605
        %v607 = vpop.f32.mrb[0].mxu0
        %608 = vmatprep.mubr.f32.mxu0 0.0
        %609 = vmatmul.mubr.f32.gmra.mrb[0].mxu0 %v372
        %v610 = vpop.f32.mrb[0].mxu0
        %v611 = vadd.f32 0.0, %v610
        %v612 = vpop.f32.mrb[0].mxu0
        %613 = vmatprep.mubr.f32.mxu0 0.0
        %614 = vmatmul.mubr.f32.gmra.mrb[0].mxu0 %v373
        %v615 = vpop.f32.mrb[0].mxu0
        %v616 = vadd.f32 0.0, %v615
        %v617 = vpop.f32.mrb[0].mxu0
        %618 = vmatprep.mubr.f32.mxu0 0.0
        %619 = vmatmul.mubr.f32.gmra.mrb[0].mxu0 %v374
        %v620 = vpop.f32.mrb[0].mxu0
        %v621 = vadd.f32 0.0, %v620
        %v622 = vpop.f32.mrb[0].mxu0
        %623 = vmatprep.mubr.f32.mxu0 0.0
        %624 = vmatmul.mubr.f32.gmra.mrb[0].mxu0 %v375
        %v625 = vpop.f32.mrb[0].mxu0
        %v626 = vadd.f32 0.0, %v625
        %v627 = vpop.f32.mrb[0].mxu0
        %628 = vmatprep.mubr.f32.mxu0 0.0
        %629 = vmatmul.mubr.f32.gmra.mrb[0].mxu0 %v376
        %v630 = vpop.f32.mrb[0].mxu0
        %v631 = vadd.f32 0.0, %v630
        %v632 = vpop.f32.mrb[0].mxu0
        %633 = vmatprep.mubr.f32.mxu0 0.0
        %634 = vmatmul.mubr.f32.gmra.mrb[0].mxu0 %v377
        %v635 = vpop.f32.mrb[0].mxu0
        %v636 = vadd.f32 0.0, %v635
        %v637 = vpop.f32.mrb[0].mxu0
        %638 = vmatprep.mubr.f32.mxu0 0.0
        %639 = vmatmul.mubr.f32.gmra.mrb[0].mxu0 %v378
        %v640 = vpop.f32.mrb[0].mxu0
        %v641 = vadd.f32 0.0, %v640
        %v642 = vpop.f32.mrb[0].mxu0
        %643 = vmatprep.mubr.f32.mxu0 0.0
        %644 = vmatmul.mubr.f32.gmra.mrb[0].mxu0 %v379
        %v645 = vpop.f32.mrb[0].mxu0
        %v646 = vadd.f32 0.0, %v645
        %v647 = vpop.f32.mrb[0].mxu0
        %648 = vmatprep.mubr.f32.mxu0 0.0
        %649 = vmatmul.mubr.f32.gmra.mrb[0].mxu0 %v380
        %v650 = vpop.f32.mrb[0].mxu0
        %v651 = vadd.f32 0.0, %v650
        %v652 = vpop.f32.mrb[0].mxu0
        %653 = vmatprep.mubr.f32.mxu0 0.0
        %654 = vmatmul.mubr.f32.gmra.mrb[0].mxu0 %v381
        %v655 = vpop.f32.mrb[0].mxu0
        %v656 = vadd.f32 0.0, %v655
        %v657 = vpop.f32.mrb[0].mxu0
        %658 = vmatprep.mubr.f32.mxu0 0.0
        %659 = vmatmul.mubr.f32.gmra.mrb[0].mxu0 %v382
        %v660 = vpop.f32.mrb[0].mxu0
        %v661 = vadd.f32 0.0, %v660
        %v662 = vpop.f32.mrb[0].mxu0
        %663 = vmatprep.mubr.f32.mxu0 0.0
        %664 = vmatmul.mubr.f32.gmra.mrb[0].mxu0 %v383
        %v665 = vpop.f32.mrb[0].mxu0
        %v666 = vadd.f32 0.0, %v665
        %v667 = vpop.f32.mrb[0].mxu0
        %668 = vmatprep.mubr.f32.mxu0 0.0
        %669 = vmatmul.mubr.f32.gmra.mrb[0].mxu0 %v384
        %v670 = vpop.f32.mrb[0].mxu0
        %v671 = vadd.f32 0.0, %v670
        %v672 = vpop.f32.mrb[0].mxu0
        %673 = vmatprep.mubr.f32.mxu0 0.0
        %674 = vmatmul.mubr.f32.gmra.mrb[0].mxu0 %v385
        %v675 = vpop.f32.mrb[0].mxu0
        %v676 = vadd.f32 0.0, %v675
        %v677 = vpop.f32.mrb[0].mxu0
        %678 = vmatprep.mubr.f32.mxu0 0.0
        %679 = vmatmul.mubr.f32.gmra.mrb[0].mxu0 %v386
        %v680 = vpop.f32.mrb[0].mxu0
        %v681 = vadd.f32 0.0, %v680
        %v682 = vpop.f32.mrb[0].mxu0
        %683 = vmatprep.mubr.f32.mxu0 0.0
        %684 = vmatmul.mubr.f32.gmra.mrb[0].mxu0 %v387
        %v685 = vpop.f32.mrb[0].mxu0
        %v686 = vadd.f32 0.0, %v685
        %v687 = vpop.f32.mrb[0].mxu0
        %688 = vmatprep.mubr.f32.mxu0 0.0
        %689 = vmatmul.mubr.f32.gmra.mrb[0].mxu0 %v388
        %v690 = vpop.f32.mrb[0].mxu0
        %v691 = vadd.f32 0.0, %v690
        %v692 = vpop.f32.mrb[0].mxu0
        %693 = vmatprep.mubr.f32.mxu0 0.0
        %694 = vmatmul.mubr.f32.gmra.mrb[0].mxu0 %v389
        %v695 = vpop.f32.mrb[0].mxu0
        %v696 = vadd.f32 0.0, %v695
        %v697 = vpop.f32.mrb[0].mxu0
        %698 = vmatprep.mubr.f32.mxu0 0.0
        %699 = vmatmul.mubr.f32.gmra.mrb[0].mxu0 %v390
        %v700 = vpop.f32.mrb[0].mxu0
        %v701 = vadd.f32 0.0, %v700
        %v702 = vpop.f32.mrb[0].mxu0
        %703 = vmatprep.mubr.f32.mxu0 0.0
        %704 = vmatmul.mubr.f32.gmra.mrb[0].mxu0 %v391
        %v705 = vpop.f32.mrb[0].mxu0
        %v706 = vadd.f32 0.0, %v705
        %v707 = vpop.f32.mrb[0].mxu0
        %708 = vmatprep.mubr.f32.mxu0 0.0
        %709 = vmatmul.mubr.f32.gmra.mrb[0].mxu0 %v392
        %v710 = vpop.f32.mrb[0].mxu0
        %v711 = vadd.f32 0.0, %v710
        %v712 = vpop.f32.mrb[0].mxu0
        %713 = vdwg.mxu0
        %714 = vmatprep.subr.mxu0 0.0
        %715 = vmatpush1.msra.mxu0 %v457
        %716 = vmatprep.subr.mxu0 0.0
        %717 = vmatpush1.msra.mxu0 %v458
        %718 = vmatprep.subr.mxu0 0.0
        %719 = vmatpush1.msra.mxu0 %v459
        %720 = vmatprep.subr.mxu0 0.0
        %721 = vmatpush1.msra.mxu0 %v460
        %722 = vmatprep.subr.mxu0 0.0
        %723 = vmatpush1.msra.mxu0 %v461
        %724 = vmatprep.subr.mxu0 0.0
        %725 = vmatpush1.msra.mxu0 %v462
        %726 = vmatprep.subr.mxu0 0.0
        %727 = vmatpush1.msra.mxu0 %v463
        %728 = vmatprep.subr.mxu0 0.0
        %729 = vmatpush1.msra.mxu0 %v464
        %730 = vmatprep.subr.mxu0 0.0
        %731 = vmatpush1.msra.mxu0 %v465
        %732 = vmatprep.subr.mxu0 0.0
        %733 = vmatpush1.msra.mxu0 %v466
        %734 = vmatprep.subr.mxu0 0.0
        %735 = vmatpush1.msra.mxu0 %v467
        %736 = vmatprep.subr.mxu0 0.0
        %737 = vmatpush1.msra.mxu0 %v468
        %738 = vmatprep.subr.mxu0 0.0
        %739 = vmatpush1.msra.mxu0 %v469
        %740 = vmatprep.subr.mxu0 0.0
        %741 = vmatpush1.msra.mxu0 %v470
        %742 = vmatprep.subr.mxu0 0.0
        %743 = vmatpush1.msra.mxu0 %v471
        %744 = vmatprep.subr.mxu0 0.0
        %745 = vmatpush1.msra.mxu0 %v472
        %746 = vmatprep.subr.mxu0 0.0
        %747 = vmatpush1.msra.mxu0 0.0
        %748 = vmatprep.subr.mxu0 0.0
        %749 = vmatpush1.msra.mxu0 0.0
        %750 = vmatprep.subr.mxu0 0.0
        %751 = vmatpush1.msra.mxu0 0.0
        %752 = vmatprep.subr.mxu0 0.0
        %753 = vmatpush1.msra.mxu0 0.0
        %754 = vmatprep.subr.mxu0 0.0
        %755 = vmatpush1.msra.mxu0 0.0
        %756 = vmatprep.subr.mxu0 0.0
        %757 = vmatpush1.msra.mxu0 0.0
        %758 = vmatprep.subr.mxu0 0.0
        %759 = vmatpush1.msra.mxu0 0.0
        %760 = vmatprep.subr.mxu0 0.0
        %761 = vmatpush1.msra.mxu0 0.0
        %762 = vmatprep.subr.mxu0 0.0
        %763 = vmatpush1.msra.mxu0 0.0
        %764 = vmatprep.subr.mxu0 0.0
        %765 = vmatpush1.msra.mxu0 0.0
        %766 = vmatprep.subr.mxu0 0.0
        %767 = vmatpush1.msra.mxu0 0.0
        %768 = vmatprep.subr.mxu0 0.0
        %769 = vmatpush1.msra.mxu0 0.0
        %770 = vmatprep.subr.mxu0 0.0
        %771 = vmatpush1.msra.mxu0 0.0
        %772 = vmatprep.subr.mxu0 0.0
        %773 = vmatpush1.msra.mxu0 0.0
        %774 = vmatprep.subr.mxu0 0.0
        %775 = vmatpush1.msra.mxu0 0.0
        %776 = vmatprep.subr.mxu0 0.0
        %777 = vmatpush1.msra.mxu0 0.0
        %778 = vmatprep.mubr.f32.mxu0 0.0
        %779 = vmatmul.mubr.f32.gmra.mrb[0].mxu0 %v329
        %v780 = vpop.f32.mrb[0].mxu0
        %v781 = vadd.f32 %v556, %v780
        %v782 = vpop.f32.mrb[0].mxu0
        %783 = vmatprep.mubr.f32.mxu0 0.0
        %784 = vmatmul.mubr.f32.gmra.mrb[0].mxu0 %v330
        %v785 = vpop.f32.mrb[0].mxu0
        %v786 = vadd.f32 %v561, %v785
        %v787 = vpop.f32.mrb[0].mxu0
        %788 = vmatprep.mubr.f32.mxu0 0.0
        %789 = vmatmul.mubr.f32.gmra.mrb[0].mxu0 %v331
        %v790 = vpop.f32.mrb[0].mxu0
        %v791 = vadd.f32 %v566, %v790
        %v792 = vpop.f32.mrb[0].mxu0
        %793 = vmatprep.mubr.f32.mxu0 0.0
        %794 = vmatmul.mubr.f32.gmra.mrb[0].mxu0 %v332
        %v795 = vpop.f32.mrb[0].mxu0
        %v796 = vadd.f32 %v571, %v795
        %v797 = vpop.f32.mrb[0].mxu0
        %798 = vmatprep.mubr.f32.mxu0 0.0
        %799 = vmatmul.mubr.f32.gmra.mrb[0].mxu0 %v333
        %v800 = vpop.f32.mrb[0].mxu0
        %v801 = vadd.f32 %v576, %v800
        %v802 = vpop.f32.mrb[0].mxu0
        %803 = vmatprep.mubr.f32.mxu0 0.0
        %804 = vmatmul.mubr.f32.gmra.mrb[0].mxu0 %v334
        %v805 = vpop.f32.mrb[0].mxu0
        %v806 = vadd.f32 %v581, %v805
        %v807 = vpop.f32.mrb[0].mxu0
        %808 = vmatprep.mubr.f32.mxu0 0.0
        %809 = vmatmul.mubr.f32.gmra.mrb[0].mxu0 %v335
        %v810 = vpop.f32.mrb[0].mxu0
        %v811 = vadd.f32 %v586, %v810
        %v812 = vpop.f32.mrb[0].mxu0
        %813 = vmatprep.mubr.f32.mxu0 0.0
        %814 = vmatmul.mubr.f32.gmra.mrb[0].mxu0 %v336
        %v815 = vpop.f32.mrb[0].mxu0
        %v816 = vadd.f32 %v591, %v815
        %v817 = vpop.f32.mrb[0].mxu0
        %818 = vmatprep.mubr.f32.mxu0 0.0
        %819 = vmatmul.mubr.f32.gmra.mrb[0].mxu0 %v337
        %v820 = vpop.f32.mrb[0].mxu0
        %v821 = vadd.f32 %v596, %v820
        %v822 = vpop.f32.mrb[0].mxu0
        %823 = vmatprep.mubr.f32.mxu0 0.0
        %824 = vmatmul.mubr.f32.gmra.mrb[0].mxu0 %v338
        %v825 = vpop.f32.mrb[0].mxu0
        %v826 = vadd.f32 %v601, %v825
        %v827 = vpop.f32.mrb[0].mxu0
        %828 = vmatprep.mubr.f32.mxu0 0.0
        %829 = vmatmul.mubr.f32.gmra.mrb[0].mxu0 %v339
        %v830 = vpop.f32.mrb[0].mxu0
        %v831 = vadd.f32 %v606, %v830
        %v832 = vpop.f32.mrb[0].mxu0
        %833 = vmatprep.mubr.f32.mxu0 0.0
        %834 = vmatmul.mubr.f32.gmra.mrb[0].mxu0 %v340
        %v835 = vpop.f32.mrb[0].mxu0
        %v836 = vadd.f32 %v611, %v835
        %v837 = vpop.f32.mrb[0].mxu0
        %838 = vmatprep.mubr.f32.mxu0 0.0
        %839 = vmatmul.mubr.f32.gmra.mrb[0].mxu0 %v341
        %v840 = vpop.f32.mrb[0].mxu0
        %v841 = vadd.f32 %v616, %v840
        %v842 = vpop.f32.mrb[0].mxu0
        %843 = vmatprep.mubr.f32.mxu0 0.0
        %844 = vmatmul.mubr.f32.gmra.mrb[0].mxu0 %v342
        %v845 = vpop.f32.mrb[0].mxu0
        %v846 = vadd.f32 %v621, %v845
        %v847 = vpop.f32.mrb[0].mxu0
        %848 = vmatprep.mubr.f32.mxu0 0.0
        %849 = vmatmul.mubr.f32.gmra.mrb[0].mxu0 %v343
        %v850 = vpop.f32.mrb[0].mxu0
        %v851 = vadd.f32 %v626, %v850
        %v852 = vpop.f32.mrb[0].mxu0
        %853 = vmatprep.mubr.f32.mxu0 0.0
        %854 = vmatmul.mubr.f32.gmra.mrb[0].mxu0 %v344
        %v855 = vpop.f32.mrb[0].mxu0
        %v856 = vadd.f32 %v631, %v855
        %v857 = vpop.f32.mrb[0].mxu0
        %858 = vmatprep.mubr.f32.mxu0 0.0
        %859 = vmatmul.mubr.f32.gmra.mrb[0].mxu0 %v345
        %v860 = vpop.f32.mrb[0].mxu0
        %v861 = vadd.f32 %v636, %v860
        %v862 = vpop.f32.mrb[0].mxu0
        %863 = vmatprep.mubr.f32.mxu0 0.0
        %864 = vmatmul.mubr.f32.gmra.mrb[0].mxu0 %v346
        %v865 = vpop.f32.mrb[0].mxu0
        %v866 = vadd.f32 %v641, %v865
        %v867 = vpop.f32.mrb[0].mxu0
        %868 = vmatprep.mubr.f32.mxu0 0.0
        %869 = vmatmul.mubr.f32.gmra.mrb[0].mxu0 %v347
        %v870 = vpop.f32.mrb[0].mxu0
        %v871 = vadd.f32 %v646, %v870
        %v872 = vpop.f32.mrb[0].mxu0
        %873 = vmatprep.mubr.f32.mxu0 0.0
        %874 = vmatmul.mubr.f32.gmra.mrb[0].mxu0 %v348
        %v875 = vpop.f32.mrb[0].mxu0
        %v876 = vadd.f32 %v651, %v875
        %v877 = vpop.f32.mrb[0].mxu0
        %878 = vmatprep.mubr.f32.mxu0 0.0
        %879 = vmatmul.mubr.f32.gmra.mrb[0].mxu0 %v349
        %v880 = vpop.f32.mrb[0].mxu0
        %v881 = vadd.f32 %v656, %v880
        %v882 = vpop.f32.mrb[0].mxu0
        %883 = vmatprep.mubr.f32.mxu0 0.0
        %884 = vmatmul.mubr.f32.gmra.mrb[0].mxu0 %v350
        %v885 = vpop.f32.mrb[0].mxu0
        %v886 = vadd.f32 %v661, %v885
        %v887 = vpop.f32.mrb[0].mxu0
        %888 = vmatprep.mubr.f32.mxu0 0.0
        %889 = vmatmul.mubr.f32.gmra.mrb[0].mxu0 %v351
        %v890 = vpop.f32.mrb[0].mxu0
        %v891 = vadd.f32 %v666, %v890
        %v892 = vpop.f32.mrb[0].mxu0
        %893 = vmatprep.mubr.f32.mxu0 0.0
        %894 = vmatmul.mubr.f32.gmra.mrb[0].mxu0 %v352
        %v895 = vpop.f32.mrb[0].mxu0
        %v896 = vadd.f32 %v671, %v895
        %v897 = vpop.f32.mrb[0].mxu0
        %898 = vmatprep.mubr.f32.mxu0 0.0
        %899 = vmatmul.mubr.f32.gmra.mrb[0].mxu0 %v353
        %v900 = vpop.f32.mrb[0].mxu0
        %v901 = vadd.f32 %v676, %v900
        %v902 = vpop.f32.mrb[0].mxu0
        %903 = vmatprep.mubr.f32.mxu0 0.0
        %904 = vmatmul.mubr.f32.gmra.mrb[0].mxu0 %v354
        %v905 = vpop.f32.mrb[0].mxu0
        %v906 = vadd.f32 %v681, %v905
        %v907 = vpop.f32.mrb[0].mxu0
        %908 = vmatprep.mubr.f32.mxu0 0.0
        %909 = vmatmul.mubr.f32.gmra.mrb[0].mxu0 %v355
        %v910 = vpop.f32.mrb[0].mxu0
        %v911 = vadd.f32 %v686, %v910
        %v912 = vpop.f32.mrb[0].mxu0
        %913 = vmatprep.mubr.f32.mxu0 0.0
        %914 = vmatmul.mubr.f32.gmra.mrb[0].mxu0 %v356
        %v915 = vpop.f32.mrb[0].mxu0
        %v916 = vadd.f32 %v691, %v915
        %v917 = vpop.f32.mrb[0].mxu0
        %918 = vmatprep.mubr.f32.mxu0 0.0
        %919 = vmatmul.mubr.f32.gmra.mrb[0].mxu0 %v357
        %v920 = vpop.f32.mrb[0].mxu0
        %v921 = vadd.f32 %v696, %v920
        %v922 = vpop.f32.mrb[0].mxu0
        %923 = vmatprep.mubr.f32.mxu0 0.0
        %924 = vmatmul.mubr.f32.gmra.mrb[0].mxu0 %v358
        %v925 = vpop.f32.mrb[0].mxu0
        %v926 = vadd.f32 %v701, %v925
        %v927 = vpop.f32.mrb[0].mxu0
        %928 = vmatprep.mubr.f32.mxu0 0.0
        %929 = vmatmul.mubr.f32.gmra.mrb[0].mxu0 %v359
        %v930 = vpop.f32.mrb[0].mxu0
        %v931 = vadd.f32 %v706, %v930
        %v932 = vpop.f32.mrb[0].mxu0
        %933 = vmatprep.mubr.f32.mxu0 0.0
        %934 = vmatmul.mubr.f32.gmra.mrb[0].mxu0 %v360
        %v935 = vpop.f32.mrb[0].mxu0
        %v936 = vadd.f32 %v711, %v935
        %v937 = vpop.f32.mrb[0].mxu0
        %938 = vdwg.mxu0
        %v939 = vld [vmem:[#allocation7 + $0x100] sm:$0xff]
        %v940 = vld [vmem:[#allocation7 + $0x108] sm:$0xff]
        %v941 = vld [vmem:[#allocation7 + $0x110] sm:$0xff]
        %v942 = vld [vmem:[#allocation7 + $0x118] sm:$0xff]
        %v943 = vld [vmem:[#allocation7 + $0x120] sm:$0xff]
        %v944 = vld [vmem:[#allocation7 + $0x128] sm:$0xff]
        %v945 = vld [vmem:[#allocation7 + $0x130] sm:$0xff]
        %v946 = vld [vmem:[#allocation7 + $0x138] sm:$0xff]
        %v947 = vld [vmem:[#allocation7 + $0x140] sm:$0xff]
        %v948 = vld [vmem:[#allocation7 + $0x148] sm:$0xff]
        %v949 = vld [vmem:[#allocation7 + $0x150] sm:$0xff]
        %v950 = vld [vmem:[#allocation7 + $0x158] sm:$0xff]
        %v951 = vld [vmem:[#allocation7 + $0x160] sm:$0xff]
        %v952 = vld [vmem:[#allocation7 + $0x168] sm:$0xff]
        %v953 = vld [vmem:[#allocation7 + $0x170] sm:$0xff]
        %v954 = vld [vmem:[#allocation7 + $0x178] sm:$0xff]
        %955 = vmatprep.subr.mxu0 0.0
        %956 = vmatpush1.msra.mxu0 %v939
        %957 = vmatprep.subr.mxu0 0.0
        %958 = vmatpush1.msra.mxu0 %v940
        %959 = vmatprep.subr.mxu0 0.0
        %960 = vmatpush1.msra.mxu0 %v941
        %961 = vmatprep.subr.mxu0 0.0
        %962 = vmatpush1.msra.mxu0 %v942
        %963 = vmatprep.subr.mxu0 0.0
        %964 = vmatpush1.msra.mxu0 %v943
        %965 = vmatprep.subr.mxu0 0.0
        %966 = vmatpush1.msra.mxu0 %v944
        %967 = vmatprep.subr.mxu0 0.0
        %968 = vmatpush1.msra.mxu0 %v945
        %969 = vmatprep.subr.mxu0 0.0
        %970 = vmatpush1.msra.mxu0 %v946
        %971 = vmatprep.subr.mxu0 0.0
        %972 = vmatpush1.msra.mxu0 %v947
        %973 = vmatprep.subr.mxu0 0.0
        %974 = vmatpush1.msra.mxu0 %v948
        %975 = vmatprep.subr.mxu0 0.0
        %976 = vmatpush1.msra.mxu0 %v949
        %977 = vmatprep.subr.mxu0 0.0
        %978 = vmatpush1.msra.mxu0 %v950
        %979 = vmatprep.subr.mxu0 0.0
        %980 = vmatpush1.msra.mxu0 %v951
        %981 = vmatprep.subr.mxu0 0.0
        %982 = vmatpush1.msra.mxu0 %v952
        %983 = vmatprep.subr.mxu0 0.0
        %984 = vmatpush1.msra.mxu0 %v953
        %985 = vmatprep.subr.mxu0 0.0
        %986 = vmatpush1.msra.mxu0 %v954
        %987 = vmatprep.subr.mxu0 0.0
        %988 = vmatpush1.msra.mxu0 0.0
        %989 = vmatprep.subr.mxu0 0.0
        %990 = vmatpush1.msra.mxu0 0.0
        %991 = vmatprep.subr.mxu0 0.0
        %992 = vmatpush1.msra.mxu0 0.0
        %993 = vmatprep.subr.mxu0 0.0
        %994 = vmatpush1.msra.mxu0 0.0
        %995 = vmatprep.subr.mxu0 0.0
        %996 = vmatpush1.msra.mxu0 0.0
        %997 = vmatprep.subr.mxu0 0.0
        %998 = vmatpush1.msra.mxu0 0.0
        %999 = vmatprep.subr.mxu0 0.0
        %1000 = vmatpush1.msra.mxu0 0.0
        %1001 = vmatprep.subr.mxu0 0.0
        %1002 = vmatpush1.msra.mxu0 0.0
        %1003 = vmatprep.subr.mxu0 0.0
        %1004 = vmatpush1.msra.mxu0 0.0
        %1005 = vmatprep.subr.mxu0 0.0
        %1006 = vmatpush1.msra.mxu0 0.0
        %1007 = vmatprep.subr.mxu0 0.0
        %1008 = vmatpush1.msra.mxu0 0.0
        %1009 = vmatprep.subr.mxu0 0.0
        %1010 = vmatpush1.msra.mxu0 0.0
        %1011 = vmatprep.subr.mxu0 0.0
        %1012 = vmatpush1.msra.mxu0 0.0
        %1013 = vmatprep.subr.mxu0 0.0
        %1014 = vmatpush1.msra.mxu0 0.0
        %1015 = vmatprep.subr.mxu0 0.0
        %1016 = vmatpush1.msra.mxu0 0.0
        %1017 = vmatprep.subr.mxu0 0.0
        %1018 = vmatpush1.msra.mxu0 0.0
        %1019 = vmatprep.mubr.f32.mxu0 0.0
        %1020 = vmatmul.mubr.f32.gmra.mrb[0].mxu0 %v425
        %v1021 = vpop.f32.mrb[0].mxu0
        %v1022 = vadd.f32 0.0, %v1021
        %v1023 = vpop.f32.mrb[0].mxu0
        %1024 = vmatprep.mubr.f32.mxu0 0.0
        %1025 = vmatmul.mubr.f32.gmra.mrb[0].mxu0 %v426
        %v1026 = vpop.f32.mrb[0].mxu0
        %v1027 = vadd.f32 0.0, %v1026
        %v1028 = vpop.f32.mrb[0].mxu0
        %1029 = vmatprep.mubr.f32.mxu0 0.0
        %1030 = vmatmul.mubr.f32.gmra.mrb[0].mxu0 %v427
        %v1031 = vpop.f32.mrb[0].mxu0
        %v1032 = vadd.f32 0.0, %v1031
        %v1033 = vpop.f32.mrb[0].mxu0
        %1034 = vmatprep.mubr.f32.mxu0 0.0
        %1035 = vmatmul.mubr.f32.gmra.mrb[0].mxu0 %v428
        %v1036 = vpop.f32.mrb[0].mxu0
        %v1037 = vadd.f32 0.0, %v1036
        %v1038 = vpop.f32.mrb[0].mxu0
        %1039 = vmatprep.mubr.f32.mxu0 0.0
        %1040 = vmatmul.mubr.f32.gmra.mrb[0].mxu0 %v429
        %v1041 = vpop.f32.mrb[0].mxu0
        %v1042 = vadd.f32 0.0, %v1041
        %v1043 = vpop.f32.mrb[0].mxu0
        %1044 = vmatprep.mubr.f32.mxu0 0.0
        %1045 = vmatmul.mubr.f32.gmra.mrb[0].mxu0 %v430
        %v1046 = vpop.f32.mrb[0].mxu0
        %v1047 = vadd.f32 0.0, %v1046
        %v1048 = vpop.f32.mrb[0].mxu0
        %1049 = vmatprep.mubr.f32.mxu0 0.0
        %1050 = vmatmul.mubr.f32.gmra.mrb[0].mxu0 %v431
        %v1051 = vpop.f32.mrb[0].mxu0
        %v1052 = vadd.f32 0.0, %v1051
        %v1053 = vpop.f32.mrb[0].mxu0
        %1054 = vmatprep.mubr.f32.mxu0 0.0
        %1055 = vmatmul.mubr.f32.gmra.mrb[0].mxu0 %v432
        %v1056 = vpop.f32.mrb[0].mxu0
        %v1057 = vadd.f32 0.0, %v1056
        %v1058 = vpop.f32.mrb[0].mxu0
        %1059 = vmatprep.mubr.f32.mxu0 0.0
        %1060 = vmatmul.mubr.f32.gmra.mrb[0].mxu0 %v433
        %v1061 = vpop.f32.mrb[0].mxu0
        %v1062 = vadd.f32 0.0, %v1061
        %v1063 = vpop.f32.mrb[0].mxu0
        %1064 = vmatprep.mubr.f32.mxu0 0.0
        %1065 = vmatmul.mubr.f32.gmra.mrb[0].mxu0 %v434
        %v1066 = vpop.f32.mrb[0].mxu0
        %v1067 = vadd.f32 0.0, %v1066
        %v1068 = vpop.f32.mrb[0].mxu0
        %1069 = vmatprep.mubr.f32.mxu0 0.0
        %1070 = vmatmul.mubr.f32.gmra.mrb[0].mxu0 %v435
        %v1071 = vpop.f32.mrb[0].mxu0
        %v1072 = vadd.f32 0.0, %v1071
        %v1073 = vpop.f32.mrb[0].mxu0
        %1074 = vmatprep.mubr.f32.mxu0 0.0
        %1075 = vmatmul.mubr.f32.gmra.mrb[0].mxu0 %v436
        %v1076 = vpop.f32.mrb[0].mxu0
        %v1077 = vadd.f32 0.0, %v1076
        %v1078 = vpop.f32.mrb[0].mxu0
        %1079 = vmatprep.mubr.f32.mxu0 0.0
        %1080 = vmatmul.mubr.f32.gmra.mrb[0].mxu0 %v437
        %v1081 = vpop.f32.mrb[0].mxu0
        %v1082 = vadd.f32 0.0, %v1081
        %v1083 = vpop.f32.mrb[0].mxu0
        %1084 = vmatprep.mubr.f32.mxu0 0.0
        %1085 = vmatmul.mubr.f32.gmra.mrb[0].mxu0 %v438
        %v1086 = vpop.f32.mrb[0].mxu0
        %v1087 = vadd.f32 0.0, %v1086
        %v1088 = vpop.f32.mrb[0].mxu0
        %1089 = vmatprep.mubr.f32.mxu0 0.0
        %1090 = vmatmul.mubr.f32.gmra.mrb[0].mxu0 %v439
        %v1091 = vpop.f32.mrb[0].mxu0
        %v1092 = vadd.f32 0.0, %v1091
        %v1093 = vpop.f32.mrb[0].mxu0
        %1094 = vmatprep.mubr.f32.mxu0 0.0
        %1095 = vmatmul.mubr.f32.gmra.mrb[0].mxu0 %v440
        %v1096 = vpop.f32.mrb[0].mxu0
        %v1097 = vadd.f32 0.0, %v1096
        %v1098 = vpop.f32.mrb[0].mxu0
        %1099 = vmatprep.mubr.f32.mxu0 0.0
        %1100 = vmatmul.mubr.f32.gmra.mrb[0].mxu0 %v441
        %v1101 = vpop.f32.mrb[0].mxu0
        %v1102 = vadd.f32 0.0, %v1101
        %v1103 = vpop.f32.mrb[0].mxu0
        %1104 = vmatprep.mubr.f32.mxu0 0.0
        %1105 = vmatmul.mubr.f32.gmra.mrb[0].mxu0 %v442
        %v1106 = vpop.f32.mrb[0].mxu0
        %v1107 = vadd.f32 0.0, %v1106
        %v1108 = vpop.f32.mrb[0].mxu0
        %1109 = vmatprep.mubr.f32.mxu0 0.0
        %1110 = vmatmul.mubr.f32.gmra.mrb[0].mxu0 %v443
        %v1111 = vpop.f32.mrb[0].mxu0
        %v1112 = vadd.f32 0.0, %v1111
        %v1113 = vpop.f32.mrb[0].mxu0
        %1114 = vmatprep.mubr.f32.mxu0 0.0
        %1115 = vmatmul.mubr.f32.gmra.mrb[0].mxu0 %v444
        %v1116 = vpop.f32.mrb[0].mxu0
        %v1117 = vadd.f32 0.0, %v1116
        %v1118 = vpop.f32.mrb[0].mxu0
        %1119 = vmatprep.mubr.f32.mxu0 0.0
        %1120 = vmatmul.mubr.f32.gmra.mrb[0].mxu0 %v445
        %v1121 = vpop.f32.mrb[0].mxu0
        %v1122 = vadd.f32 0.0, %v1121
        %v1123 = vpop.f32.mrb[0].mxu0
        %1124 = vmatprep.mubr.f32.mxu0 0.0
        %1125 = vmatmul.mubr.f32.gmra.mrb[0].mxu0 %v446
        %v1126 = vpop.f32.mrb[0].mxu0
        %v1127 = vadd.f32 0.0, %v1126
        %v1128 = vpop.f32.mrb[0].mxu0
        %1129 = vmatprep.mubr.f32.mxu0 0.0
        %1130 = vmatmul.mubr.f32.gmra.mrb[0].mxu0 %v447
        %v1131 = vpop.f32.mrb[0].mxu0
        %v1132 = vadd.f32 0.0, %v1131
        %v1133 = vpop.f32.mrb[0].mxu0
        %1134 = vmatprep.mubr.f32.mxu0 0.0
        %1135 = vmatmul.mubr.f32.gmra.mrb[0].mxu0 %v448
        %v1136 = vpop.f32.mrb[0].mxu0
        %v1137 = vadd.f32 0.0, %v1136
        %v1138 = vpop.f32.mrb[0].mxu0
        %1139 = vmatprep.mubr.f32.mxu0 0.0
        %1140 = vmatmul.mubr.f32.gmra.mrb[0].mxu0 %v449
        %v1141 = vpop.f32.mrb[0].mxu0
        %v1142 = vadd.f32 0.0, %v1141
        %v1143 = vpop.f32.mrb[0].mxu0
        %1144 = vmatprep.mubr.f32.mxu0 0.0
        %1145 = vmatmul.mubr.f32.gmra.mrb[0].mxu0 %v450
        %v1146 = vpop.f32.mrb[0].mxu0
        %v1147 = vadd.f32 0.0, %v1146
        %v1148 = vpop.f32.mrb[0].mxu0
        %1149 = vmatprep.mubr.f32.mxu0 0.0
        %1150 = vmatmul.mubr.f32.gmra.mrb[0].mxu0 %v451
        %v1151 = vpop.f32.mrb[0].mxu0
        %v1152 = vadd.f32 0.0, %v1151
        %v1153 = vpop.f32.mrb[0].mxu0
        %1154 = vmatprep.mubr.f32.mxu0 0.0
        %1155 = vmatmul.mubr.f32.gmra.mrb[0].mxu0 %v452
        %v1156 = vpop.f32.mrb[0].mxu0
        %v1157 = vadd.f32 0.0, %v1156
        %v1158 = vpop.f32.mrb[0].mxu0
        %1159 = vmatprep.mubr.f32.mxu0 0.0
        %1160 = vmatmul.mubr.f32.gmra.mrb[0].mxu0 %v453
        %v1161 = vpop.f32.mrb[0].mxu0
        %v1162 = vadd.f32 0.0, %v1161
        %v1163 = vpop.f32.mrb[0].mxu0
        %1164 = vmatprep.mubr.f32.mxu0 0.0
        %1165 = vmatmul.mubr.f32.gmra.mrb[0].mxu0 %v454
        %v1166 = vpop.f32.mrb[0].mxu0
        %v1167 = vadd.f32 0.0, %v1166
        %v1168 = vpop.f32.mrb[0].mxu0
        %1169 = vmatprep.mubr.f32.mxu0 0.0
        %1170 = vmatmul.mubr.f32.gmra.mrb[0].mxu0 %v455
        %v1171 = vpop.f32.mrb[0].mxu0
        %v1172 = vadd.f32 0.0, %v1171
        %v1173 = vpop.f32.mrb[0].mxu0
        %1174 = vmatprep.mubr.f32.mxu0 0.0
        %1175 = vmatmul.mubr.f32.gmra.mrb[0].mxu0 %v456
        %v1176 = vpop.f32.mrb[0].mxu0
        %v1177 = vadd.f32 0.0, %v1176
        %v1178 = vpop.f32.mrb[0].mxu0
        %1179 = vdwg.mxu0
        %v1180 = vadd.f32 %v781, %v1022
        %v1181 = vadd.f32 %v786, %v1027
        %v1182 = vadd.f32 %v791, %v1032
        %v1183 = vadd.f32 %v796, %v1037
        %v1184 = vadd.f32 %v801, %v1042
        %v1185 = vadd.f32 %v806, %v1047
        %v1186 = vadd.f32 %v811, %v1052
        %v1187 = vadd.f32 %v816, %v1057
        %v1188 = vadd.f32 %v821, %v1062
        %v1189 = vadd.f32 %v826, %v1067
        %v1190 = vadd.f32 %v831, %v1072
        %v1191 = vadd.f32 %v836, %v1077
        %v1192 = vadd.f32 %v841, %v1082
        %v1193 = vadd.f32 %v846, %v1087
        %v1194 = vadd.f32 %v851, %v1092
        %v1195 = vadd.f32 %v856, %v1097
        %v1196 = vadd.f32 %v861, %v1102
        %v1197 = vadd.f32 %v866, %v1107
        %v1198 = vadd.f32 %v871, %v1112
        %v1199 = vadd.f32 %v876, %v1117
        %v1200 = vadd.f32 %v881, %v1122
        %v1201 = vadd.f32 %v886, %v1127
        %v1202 = vadd.f32 %v891, %v1132
        %v1203 = vadd.f32 %v896, %v1137
        %v1204 = vadd.f32 %v901, %v1142
        %v1205 = vadd.f32 %v906, %v1147
        %v1206 = vadd.f32 %v911, %v1152
        %v1207 = vadd.f32 %v916, %v1157
        %v1208 = vadd.f32 %v921, %v1162
        %v1209 = vadd.f32 %v926, %v1167
        %v1210 = vadd.f32 %v931, %v1172
        %v1211 = vadd.f32 %v936, %v1177
        %v1212 = vld [vmem:[%s3] sm:$0x1]
        %v1214 = vlaneseq
        %v1215 = vshrl.u32 %v1214, 7
        %v1216 = vsub.s32 0, %v1215
        %v1217 = vrot.slane %v1212, %v1216
        %v1219 = vadd.f32 %v1180, %v1217
        %v1220 = vadd.f32 %v1181, %v1217
        %v1221 = vadd.f32 %v1182, %v1217
        %v1222 = vadd.f32 %v1183, %v1217
        %v1223 = vadd.f32 %v1184, %v1217
        %v1224 = vadd.f32 %v1185, %v1217
        %v1225 = vadd.f32 %v1186, %v1217
        %v1226 = vadd.f32 %v1187, %v1217
        %v1227 = vadd.f32 %v1188, %v1217
        %v1228 = vadd.f32 %v1189, %v1217
        %v1229 = vadd.f32 %v1190, %v1217
        %v1230 = vadd.f32 %v1191, %v1217
        %v1231 = vadd.f32 %v1192, %v1217
        %v1232 = vadd.f32 %v1193, %v1217
        %v1233 = vadd.f32 %v1194, %v1217
        %v1234 = vadd.f32 %v1195, %v1217
        %v1235 = vadd.f32 %v1196, %v1217
        %v1236 = vadd.f32 %v1197, %v1217
        %v1237 = vadd.f32 %v1198, %v1217
        %v1238 = vadd.f32 %v1199, %v1217
        %v1239 = vadd.f32 %v1200, %v1217
        %v1240 = vadd.f32 %v1201, %v1217
        %v1241 = vadd.f32 %v1202, %v1217
        %v1242 = vadd.f32 %v1203, %v1217
        %v1243 = vadd.f32 %v1204, %v1217
        %v1244 = vadd.f32 %v1205, %v1217
        %v1245 = vadd.f32 %v1206, %v1217
        %v1246 = vadd.f32 %v1207, %v1217
        %v1247 = vadd.f32 %v1208, %v1217
        %v1248 = vadd.f32 %v1209, %v1217
        %v1249 = vadd.f32 %v1210, %v1217
        %v1250 = vadd.f32 %v1211, %v1217
        %v1251 = vxor.u32 %v1219, 2147483648
        %v1252 = vxor.u32 %v1220, 2147483648
        %v1253 = vxor.u32 %v1221, 2147483648
        %v1254 = vxor.u32 %v1222, 2147483648
        %v1255 = vxor.u32 %v1223, 2147483648
        %v1256 = vxor.u32 %v1224, 2147483648
        %v1257 = vxor.u32 %v1225, 2147483648
        %v1258 = vxor.u32 %v1226, 2147483648
        %v1259 = vxor.u32 %v1227, 2147483648
        %v1260 = vxor.u32 %v1228, 2147483648
        %v1261 = vxor.u32 %v1229, 2147483648
        %v1262 = vxor.u32 %v1230, 2147483648
        %v1263 = vxor.u32 %v1231, 2147483648
        %v1264 = vxor.u32 %v1232, 2147483648
        %v1265 = vxor.u32 %v1233, 2147483648
        %v1266 = vxor.u32 %v1234, 2147483648
        %v1267 = vxor.u32 %v1235, 2147483648
        %v1268 = vxor.u32 %v1236, 2147483648
        %v1269 = vxor.u32 %v1237, 2147483648
        %v1270 = vxor.u32 %v1238, 2147483648
        %v1271 = vxor.u32 %v1239, 2147483648
        %v1272 = vxor.u32 %v1240, 2147483648
        %v1273 = vxor.u32 %v1241, 2147483648
        %v1274 = vxor.u32 %v1242, 2147483648
        %v1275 = vxor.u32 %v1243, 2147483648
        %v1276 = vxor.u32 %v1244, 2147483648
        %v1277 = vxor.u32 %v1245, 2147483648
        %v1278 = vxor.u32 %v1246, 2147483648
        %v1279 = vxor.u32 %v1247, 2147483648
        %v1280 = vxor.u32 %v1248, 2147483648
        %v1281 = vxor.u32 %v1249, 2147483648
        %v1282 = vxor.u32 %v1250, 2147483648
        %v1283 = vmul.f32 %v1251, 1.442695
        %v1284 = vpow.pop %v1283
        %v1285 = vmul.f32 %v1252, 1.442695
        %v1286 = vpow.pop %v1285
        %v1287 = vmul.f32 %v1253, 1.442695
        %v1288 = vpow.pop %v1287
        %v1289 = vmul.f32 %v1254, 1.442695
        %v1290 = vpow.pop %v1289
        %v1291 = vmul.f32 %v1255, 1.442695
        %v1292 = vpow.pop %v1291
        %v1293 = vmul.f32 %v1256, 1.442695
        %v1294 = vpow.pop %v1293
        %v1295 = vmul.f32 %v1257, 1.442695
        %v1296 = vpow.pop %v1295
        %v1297 = vmul.f32 %v1258, 1.442695
        %v1298 = vpow.pop %v1297
        %v1299 = vmul.f32 %v1259, 1.442695
        %v1300 = vpow.pop %v1299
        %v1301 = vmul.f32 %v1260, 1.442695
        %v1302 = vpow.pop %v1301
        %v1303 = vmul.f32 %v1261, 1.442695
        %v1304 = vpow.pop %v1303
        %v1305 = vmul.f32 %v1262, 1.442695
        %v1306 = vpow.pop %v1305
        %v1307 = vmul.f32 %v1263, 1.442695
        %v1308 = vpow.pop %v1307
        %v1309 = vmul.f32 %v1264, 1.442695
        %v1310 = vpow.pop %v1309
        %v1311 = vmul.f32 %v1265, 1.442695
        %v1312 = vpow.pop %v1311
        %v1313 = vmul.f32 %v1266, 1.442695
        %v1314 = vpow.pop %v1313
        %v1315 = vmul.f32 %v1267, 1.442695
        %v1316 = vpow.pop %v1315
        %v1317 = vmul.f32 %v1268, 1.442695
        %v1318 = vpow.pop %v1317
        %v1319 = vmul.f32 %v1269, 1.442695
        %v1320 = vpow.pop %v1319
        %v1321 = vmul.f32 %v1270, 1.442695
        %v1322 = vpow.pop %v1321
        %v1323 = vmul.f32 %v1271, 1.442695
        %v1324 = vpow.pop %v1323
        %v1325 = vmul.f32 %v1272, 1.442695
        %v1326 = vpow.pop %v1325
        %v1327 = vmul.f32 %v1273, 1.442695
        %v1328 = vpow.pop %v1327
        %v1329 = vmul.f32 %v1274, 1.442695
        %v1330 = vpow.pop %v1329
        %v1331 = vmul.f32 %v1275, 1.442695
        %v1332 = vpow.pop %v1331
        %v1333 = vmul.f32 %v1276, 1.442695
        %v1334 = vpow.pop %v1333
        %v1335 = vmul.f32 %v1277, 1.442695
        %v1336 = vpow.pop %v1335
        %v1337 = vmul.f32 %v1278, 1.442695
        %v1338 = vpow.pop %v1337
        %v1339 = vmul.f32 %v1279, 1.442695
        %v1340 = vpow.pop %v1339
        %v1341 = vmul.f32 %v1280, 1.442695
        %v1342 = vpow.pop %v1341
        %v1343 = vmul.f32 %v1281, 1.442695
        %v1344 = vpow.pop %v1343
        %v1345 = vmul.f32 %v1282, 1.442695
        %v1346 = vpow.pop %v1345
        %v1347 = vadd.f32 %v1284, 1.0
        %v1348 = vadd.f32 %v1286, 1.0
        %v1349 = vadd.f32 %v1288, 1.0
        %v1350 = vadd.f32 %v1290, 1.0
        %v1351 = vadd.f32 %v1292, 1.0
        %v1352 = vadd.f32 %v1294, 1.0
        %v1353 = vadd.f32 %v1296, 1.0
        %v1354 = vadd.f32 %v1298, 1.0
        %v1355 = vadd.f32 %v1300, 1.0
        %v1356 = vadd.f32 %v1302, 1.0
        %v1357 = vadd.f32 %v1304, 1.0
        %v1358 = vadd.f32 %v1306, 1.0
        %v1359 = vadd.f32 %v1308, 1.0
        %v1360 = vadd.f32 %v1310, 1.0
        %v1361 = vadd.f32 %v1312, 1.0
        %v1362 = vadd.f32 %v1314, 1.0
        %v1363 = vadd.f32 %v1316, 1.0
        %v1364 = vadd.f32 %v1318, 1.0
        %v1365 = vadd.f32 %v1320, 1.0
        %v1366 = vadd.f32 %v1322, 1.0
        %v1367 = vadd.f32 %v1324, 1.0
        %v1368 = vadd.f32 %v1326, 1.0
        %v1369 = vadd.f32 %v1328, 1.0
        %v1370 = vadd.f32 %v1330, 1.0
        %v1371 = vadd.f32 %v1332, 1.0
        %v1372 = vadd.f32 %v1334, 1.0
        %v1373 = vadd.f32 %v1336, 1.0
        %v1374 = vadd.f32 %v1338, 1.0
        %v1375 = vadd.f32 %v1340, 1.0
        %v1376 = vadd.f32 %v1342, 1.0
        %v1377 = vadd.f32 %v1344, 1.0
        %v1378 = vadd.f32 %v1346, 1.0
        %v1379 = vrcp.pop %v1347
        %v1380 = vmul.f32 1.0, %v1379
        %v1381 = vrcp.pop %v1348
        %v1382 = vmul.f32 1.0, %v1381
        %v1383 = vrcp.pop %v1349
        %v1384 = vmul.f32 1.0, %v1383
        %v1385 = vrcp.pop %v1350
        %v1386 = vmul.f32 1.0, %v1385
        %v1387 = vrcp.pop %v1351
        %v1388 = vmul.f32 1.0, %v1387
        %v1389 = vrcp.pop %v1352
        %v1390 = vmul.f32 1.0, %v1389
        %v1391 = vrcp.pop %v1353
        %v1392 = vmul.f32 1.0, %v1391
        %v1393 = vrcp.pop %v1354
        %v1394 = vmul.f32 1.0, %v1393
        %v1395 = vrcp.pop %v1355
        %v1396 = vmul.f32 1.0, %v1395
        %v1397 = vrcp.pop %v1356
        %v1398 = vmul.f32 1.0, %v1397
        %v1399 = vrcp.pop %v1357
        %v1400 = vmul.f32 1.0, %v1399
        %v1401 = vrcp.pop %v1358
        %v1402 = vmul.f32 1.0, %v1401
        %v1403 = vrcp.pop %v1359
        %v1404 = vmul.f32 1.0, %v1403
        %v1405 = vrcp.pop %v1360
        %v1406 = vmul.f32 1.0, %v1405
        %v1407 = vrcp.pop %v1361
        %v1408 = vmul.f32 1.0, %v1407
        %v1409 = vrcp.pop %v1362
        %v1410 = vmul.f32 1.0, %v1409
        %v1411 = vrcp.pop %v1363
        %v1412 = vmul.f32 1.0, %v1411
        %v1413 = vrcp.pop %v1364
        %v1414 = vmul.f32 1.0, %v1413
        %v1415 = vrcp.pop %v1365
        %v1416 = vmul.f32 1.0, %v1415
        %v1417 = vrcp.pop %v1366
        %v1418 = vmul.f32 1.0, %v1417
        %v1419 = vrcp.pop %v1367
        %v1420 = vmul.f32 1.0, %v1419
        %v1421 = vrcp.pop %v1368
        %v1422 = vmul.f32 1.0, %v1421
        %v1423 = vrcp.pop %v1369
        %v1424 = vmul.f32 1.0, %v1423
        %v1425 = vrcp.pop %v1370
        %v1426 = vmul.f32 1.0, %v1425
        %v1427 = vrcp.pop %v1371
        %v1428 = vmul.f32 1.0, %v1427
        %v1429 = vrcp.pop %v1372
        %v1430 = vmul.f32 1.0, %v1429
        %v1431 = vrcp.pop %v1373
        %v1432 = vmul.f32 1.0, %v1431
        %v1433 = vrcp.pop %v1374
        %v1434 = vmul.f32 1.0, %v1433
        %v1435 = vrcp.pop %v1375
        %v1436 = vmul.f32 1.0, %v1435
        %v1437 = vrcp.pop %v1376
        %v1438 = vmul.f32 1.0, %v1437
        %v1439 = vrcp.pop %v1377
        %v1440 = vmul.f32 1.0, %v1439
        %v1441 = vrcp.pop %v1378
        %v1442 = vmul.f32 1.0, %v1441
        %v1443 = vld [vmem:[#allocation10] sm:$0xff]
        %v1444 = vld [vmem:[#allocation10 + $0x8] sm:$0xff]
        %v1445 = vld [vmem:[#allocation10 + $0x10] sm:$0xff]
        %v1446 = vld [vmem:[#allocation10 + $0x18] sm:$0xff]
        %v1447 = vld [vmem:[#allocation10 + $0x20] sm:$0xff]
        %v1448 = vld [vmem:[#allocation10 + $0x28] sm:$0xff]
        %v1449 = vld [vmem:[#allocation10 + $0x30] sm:$0xff]
        %v1450 = vld [vmem:[#allocation10 + $0x38] sm:$0xff]
        %v1451 = vld [vmem:[#allocation10 + $0x40] sm:$0xff]
        %v1452 = vld [vmem:[#allocation10 + $0x48] sm:$0xff]
        %v1453 = vld [vmem:[#allocation10 + $0x50] sm:$0xff]
        %v1454 = vld [vmem:[#allocation10 + $0x58] sm:$0xff]
        %v1455 = vld [vmem:[#allocation10 + $0x60] sm:$0xff]
        %v1456 = vld [vmem:[#allocation10 + $0x68] sm:$0xff]
        %v1457 = vld [vmem:[#allocation10 + $0x70] sm:$0xff]
        %v1458 = vld [vmem:[#allocation10 + $0x78] sm:$0xff]
        %v1459 = vld [vmem:[%s5] sm:$0x1]
        %v1461 = vlaneseq
        %v1462 = vshrl.u32 %v1461, 7
        %v1463 = vsub.s32 0, %v1462
        %v1464 = vrot.slane %v1459, %v1463
        %1466 = vmatprep.subr.mxu0 0.0
        %1467 = vmatpush1.msra.mxu0 %v1443
        %1468 = vmatprep.subr.mxu0 0.0
        %1469 = vmatpush1.msra.mxu0 %v1444
        %1470 = vmatprep.subr.mxu0 0.0
        %1471 = vmatpush1.msra.mxu0 %v1445
        %1472 = vmatprep.subr.mxu0 0.0
        %1473 = vmatpush1.msra.mxu0 %v1446
        %1474 = vmatprep.subr.mxu0 0.0
        %1475 = vmatpush1.msra.mxu0 %v1447
        %1476 = vmatprep.subr.mxu0 0.0
        %1477 = vmatpush1.msra.mxu0 %v1448
        %1478 = vmatprep.subr.mxu0 0.0
        %1479 = vmatpush1.msra.mxu0 %v1449
        %1480 = vmatprep.subr.mxu0 0.0
        %1481 = vmatpush1.msra.mxu0 %v1450
        %1482 = vmatprep.subr.mxu0 0.0
        %1483 = vmatpush1.msra.mxu0 %v1451
        %1484 = vmatprep.subr.mxu0 0.0
        %1485 = vmatpush1.msra.mxu0 %v1452
        %1486 = vmatprep.subr.mxu0 0.0
        %1487 = vmatpush1.msra.mxu0 %v1453
        %1488 = vmatprep.subr.mxu0 0.0
        %1489 = vmatpush1.msra.mxu0 %v1454
        %1490 = vmatprep.subr.mxu0 0.0
        %1491 = vmatpush1.msra.mxu0 %v1455
        %1492 = vmatprep.subr.mxu0 0.0
        %1493 = vmatpush1.msra.mxu0 %v1456
        %1494 = vmatprep.subr.mxu0 0.0
        %1495 = vmatpush1.msra.mxu0 %v1457
        %1496 = vmatprep.subr.mxu0 0.0
        %1497 = vmatpush1.msra.mxu0 %v1458
        %1498 = vmatprep.subr.mxu0 0.0
        %1499 = vmatpush1.msra.mxu0 0.0
        %1500 = vmatprep.subr.mxu0 0.0
        %1501 = vmatpush1.msra.mxu0 0.0
        %1502 = vmatprep.subr.mxu0 0.0
        %1503 = vmatpush1.msra.mxu0 0.0
        %1504 = vmatprep.subr.mxu0 0.0
        %1505 = vmatpush1.msra.mxu0 0.0
        %1506 = vmatprep.subr.mxu0 0.0
        %1507 = vmatpush1.msra.mxu0 0.0
        %1508 = vmatprep.subr.mxu0 0.0
        %1509 = vmatpush1.msra.mxu0 0.0
        %1510 = vmatprep.subr.mxu0 0.0
        %1511 = vmatpush1.msra.mxu0 0.0
        %1512 = vmatprep.subr.mxu0 0.0
        %1513 = vmatpush1.msra.mxu0 0.0
        %1514 = vmatprep.subr.mxu0 0.0
        %1515 = vmatpush1.msra.mxu0 0.0
        %1516 = vmatprep.subr.mxu0 0.0
        %1517 = vmatpush1.msra.mxu0 0.0
        %1518 = vmatprep.subr.mxu0 0.0
        %1519 = vmatpush1.msra.mxu0 0.0
        %1520 = vmatprep.subr.mxu0 0.0
        %1521 = vmatpush1.msra.mxu0 0.0
        %1522 = vmatprep.subr.mxu0 0.0
        %1523 = vmatpush1.msra.mxu0 0.0
        %1524 = vmatprep.subr.mxu0 0.0
        %1525 = vmatpush1.msra.mxu0 0.0
        %1526 = vmatprep.subr.mxu0 0.0
        %1527 = vmatpush1.msra.mxu0 0.0
        %1528 = vmatprep.subr.mxu0 0.0
        %1529 = vmatpush1.msra.mxu0 0.0
        %1530 = vmatprep.mubr.f32.mxu0 0.0
        %1531 = vmatmul.mubr.f32.gmra.mrb[0].mxu0 %v1380
        %v1532 = vpop.f32.mrb[0].mxu0
        %v1533 = vadd.f32 %v1464, %v1532
        %v1534 = vpop.f32.mrb[0].mxu0
        %1535 = vmatprep.mubr.f32.mxu0 0.0
        %1536 = vmatmul.mubr.f32.gmra.mrb[0].mxu0 %v1382
        %v1537 = vpop.f32.mrb[0].mxu0
        %v1538 = vadd.f32 %v1464, %v1537
        %v1539 = vpop.f32.mrb[0].mxu0
        %1540 = vmatprep.mubr.f32.mxu0 0.0
        %1541 = vmatmul.mubr.f32.gmra.mrb[0].mxu0 %v1384
        %v1542 = vpop.f32.mrb[0].mxu0
        %v1543 = vadd.f32 %v1464, %v1542
        %v1544 = vpop.f32.mrb[0].mxu0
        %1545 = vmatprep.mubr.f32.mxu0 0.0
        %1546 = vmatmul.mubr.f32.gmra.mrb[0].mxu0 %v1386
        %v1547 = vpop.f32.mrb[0].mxu0
        %v1548 = vadd.f32 %v1464, %v1547
        %v1549 = vpop.f32.mrb[0].mxu0
        %1550 = vmatprep.mubr.f32.mxu0 0.0
        %1551 = vmatmul.mubr.f32.gmra.mrb[0].mxu0 %v1388
        %v1552 = vpop.f32.mrb[0].mxu0
        %v1553 = vadd.f32 %v1464, %v1552
        %v1554 = vpop.f32.mrb[0].mxu0
        %1555 = vmatprep.mubr.f32.mxu0 0.0
        %1556 = vmatmul.mubr.f32.gmra.mrb[0].mxu0 %v1390
        %v1557 = vpop.f32.mrb[0].mxu0
        %v1558 = vadd.f32 %v1464, %v1557
        %v1559 = vpop.f32.mrb[0].mxu0
        %1560 = vmatprep.mubr.f32.mxu0 0.0
        %1561 = vmatmul.mubr.f32.gmra.mrb[0].mxu0 %v1392
        %v1562 = vpop.f32.mrb[0].mxu0
        %v1563 = vadd.f32 %v1464, %v1562
        %v1564 = vpop.f32.mrb[0].mxu0
        %1565 = vmatprep.mubr.f32.mxu0 0.0
        %1566 = vmatmul.mubr.f32.gmra.mrb[0].mxu0 %v1394
        %v1567 = vpop.f32.mrb[0].mxu0
        %v1568 = vadd.f32 %v1464, %v1567
        %v1569 = vpop.f32.mrb[0].mxu0
        %1570 = vmatprep.mubr.f32.mxu0 0.0
        %1571 = vmatmul.mubr.f32.gmra.mrb[0].mxu0 %v1396
        %v1572 = vpop.f32.mrb[0].mxu0
        %v1573 = vadd.f32 %v1464, %v1572
        %v1574 = vpop.f32.mrb[0].mxu0
        %1575 = vmatprep.mubr.f32.mxu0 0.0
        %1576 = vmatmul.mubr.f32.gmra.mrb[0].mxu0 %v1398
        %v1577 = vpop.f32.mrb[0].mxu0
        %v1578 = vadd.f32 %v1464, %v1577
        %v1579 = vpop.f32.mrb[0].mxu0
        %1580 = vmatprep.mubr.f32.mxu0 0.0
        %1581 = vmatmul.mubr.f32.gmra.mrb[0].mxu0 %v1400
        %v1582 = vpop.f32.mrb[0].mxu0
        %v1583 = vadd.f32 %v1464, %v1582
        %v1584 = vpop.f32.mrb[0].mxu0
        %1585 = vmatprep.mubr.f32.mxu0 0.0
        %1586 = vmatmul.mubr.f32.gmra.mrb[0].mxu0 %v1402
        %v1587 = vpop.f32.mrb[0].mxu0
        %v1588 = vadd.f32 %v1464, %v1587
        %v1589 = vpop.f32.mrb[0].mxu0
        %1590 = vmatprep.mubr.f32.mxu0 0.0
        %1591 = vmatmul.mubr.f32.gmra.mrb[0].mxu0 %v1404
        %v1592 = vpop.f32.mrb[0].mxu0
        %v1593 = vadd.f32 %v1464, %v1592
        %v1594 = vpop.f32.mrb[0].mxu0
        %1595 = vmatprep.mubr.f32.mxu0 0.0
        %1596 = vmatmul.mubr.f32.gmra.mrb[0].mxu0 %v1406
        %v1597 = vpop.f32.mrb[0].mxu0
        %v1598 = vadd.f32 %v1464, %v1597
        %v1599 = vpop.f32.mrb[0].mxu0
        %1600 = vmatprep.mubr.f32.mxu0 0.0
        %1601 = vmatmul.mubr.f32.gmra.mrb[0].mxu0 %v1408
        %v1602 = vpop.f32.mrb[0].mxu0
        %v1603 = vadd.f32 %v1464, %v1602
        %v1604 = vpop.f32.mrb[0].mxu0
        %1605 = vmatprep.mubr.f32.mxu0 0.0
        %1606 = vmatmul.mubr.f32.gmra.mrb[0].mxu0 %v1410
        %v1607 = vpop.f32.mrb[0].mxu0
        %v1608 = vadd.f32 %v1464, %v1607
        %v1609 = vpop.f32.mrb[0].mxu0
        %1610 = vmatprep.mubr.f32.mxu0 0.0
        %1611 = vmatmul.mubr.f32.gmra.mrb[0].mxu0 %v1412
        %v1612 = vpop.f32.mrb[0].mxu0
        %v1613 = vadd.f32 %v1464, %v1612
        %v1614 = vpop.f32.mrb[0].mxu0
        %1615 = vmatprep.mubr.f32.mxu0 0.0
        %1616 = vmatmul.mubr.f32.gmra.mrb[0].mxu0 %v1414
        %v1617 = vpop.f32.mrb[0].mxu0
        %v1618 = vadd.f32 %v1464, %v1617
        %v1619 = vpop.f32.mrb[0].mxu0
        %1620 = vmatprep.mubr.f32.mxu0 0.0
        %1621 = vmatmul.mubr.f32.gmra.mrb[0].mxu0 %v1416
        %v1622 = vpop.f32.mrb[0].mxu0
        %v1623 = vadd.f32 %v1464, %v1622
        %v1624 = vpop.f32.mrb[0].mxu0
        %1625 = vmatprep.mubr.f32.mxu0 0.0
        %1626 = vmatmul.mubr.f32.gmra.mrb[0].mxu0 %v1418
        %v1627 = vpop.f32.mrb[0].mxu0
        %v1628 = vadd.f32 %v1464, %v1627
        %v1629 = vpop.f32.mrb[0].mxu0
        %1630 = vmatprep.mubr.f32.mxu0 0.0
        %1631 = vmatmul.mubr.f32.gmra.mrb[0].mxu0 %v1420
        %v1632 = vpop.f32.mrb[0].mxu0
        %v1633 = vadd.f32 %v1464, %v1632
        %v1634 = vpop.f32.mrb[0].mxu0
        %1635 = vmatprep.mubr.f32.mxu0 0.0
        %1636 = vmatmul.mubr.f32.gmra.mrb[0].mxu0 %v1422
        %v1637 = vpop.f32.mrb[0].mxu0
        %v1638 = vadd.f32 %v1464, %v1637
        %v1639 = vpop.f32.mrb[0].mxu0
        %1640 = vmatprep.mubr.f32.mxu0 0.0
        %1641 = vmatmul.mubr.f32.gmra.mrb[0].mxu0 %v1424
        %v1642 = vpop.f32.mrb[0].mxu0
        %v1643 = vadd.f32 %v1464, %v1642
        %v1644 = vpop.f32.mrb[0].mxu0
        %1645 = vmatprep.mubr.f32.mxu0 0.0
        %1646 = vmatmul.mubr.f32.gmra.mrb[0].mxu0 %v1426
        %v1647 = vpop.f32.mrb[0].mxu0
        %v1648 = vadd.f32 %v1464, %v1647
        %v1649 = vpop.f32.mrb[0].mxu0
        %1650 = vmatprep.mubr.f32.mxu0 0.0
        %1651 = vmatmul.mubr.f32.gmra.mrb[0].mxu0 %v1428
        %v1652 = vpop.f32.mrb[0].mxu0
        %v1653 = vadd.f32 %v1464, %v1652
        %v1654 = vpop.f32.mrb[0].mxu0
        %1655 = vmatprep.mubr.f32.mxu0 0.0
        %1656 = vmatmul.mubr.f32.gmra.mrb[0].mxu0 %v1430
        %v1657 = vpop.f32.mrb[0].mxu0
        %v1658 = vadd.f32 %v1464, %v1657
        %v1659 = vpop.f32.mrb[0].mxu0
        %1660 = vmatprep.mubr.f32.mxu0 0.0
        %1661 = vmatmul.mubr.f32.gmra.mrb[0].mxu0 %v1432
        %v1662 = vpop.f32.mrb[0].mxu0
        %v1663 = vadd.f32 %v1464, %v1662
        %v1664 = vpop.f32.mrb[0].mxu0
        %1665 = vmatprep.mubr.f32.mxu0 0.0
        %1666 = vmatmul.mubr.f32.gmra.mrb[0].mxu0 %v1434
        %v1667 = vpop.f32.mrb[0].mxu0
        %v1668 = vadd.f32 %v1464, %v1667
        %v1669 = vpop.f32.mrb[0].mxu0
        %1670 = vmatprep.mubr.f32.mxu0 0.0
        %1671 = vmatmul.mubr.f32.gmra.mrb[0].mxu0 %v1436
        %v1672 = vpop.f32.mrb[0].mxu0
        %v1673 = vadd.f32 %v1464, %v1672
        %v1674 = vpop.f32.mrb[0].mxu0
        %1675 = vmatprep.mubr.f32.mxu0 0.0
        %1676 = vmatmul.mubr.f32.gmra.mrb[0].mxu0 %v1438
        %v1677 = vpop.f32.mrb[0].mxu0
        %v1678 = vadd.f32 %v1464, %v1677
        %v1679 = vpop.f32.mrb[0].mxu0
        %1680 = vmatprep.mubr.f32.mxu0 0.0
        %1681 = vmatmul.mubr.f32.gmra.mrb[0].mxu0 %v1440
        %v1682 = vpop.f32.mrb[0].mxu0
        %v1683 = vadd.f32 %v1464, %v1682
        %v1684 = vpop.f32.mrb[0].mxu0
        %1685 = vmatprep.mubr.f32.mxu0 0.0
        %1686 = vmatmul.mubr.f32.gmra.mrb[0].mxu0 %v1442
        %v1687 = vpop.f32.mrb[0].mxu0
        %v1688 = vadd.f32 %v1464, %v1687
        %v1689 = vpop.f32.mrb[0].mxu0
        %1690 = vdwg.mxu0
        %1691 = vst [vmem:[%s211] sm:$0xff] %v1533
        %1692 = vst [vmem:[%s211 + $0x8] sm:$0xff] %v1538
        %1693 = vst [vmem:[%s211 + $0x10] sm:$0xff] %v1543
        %1694 = vst [vmem:[%s211 + $0x18] sm:$0xff] %v1548
        %1695 = vst [vmem:[%s211 + $0x20] sm:$0xff] %v1553
        %1696 = vst [vmem:[%s211 + $0x28] sm:$0xff] %v1558
        %1697 = vst [vmem:[%s211 + $0x30] sm:$0xff] %v1563
        %1698 = vst [vmem:[%s211 + $0x38] sm:$0xff] %v1568
        %1699 = vst [vmem:[%s211 + $0x40] sm:$0xff] %v1573
        %1700 = vst [vmem:[%s211 + $0x48] sm:$0xff] %v1578
        %1701 = vst [vmem:[%s211 + $0x50] sm:$0xff] %v1583
        %1702 = vst [vmem:[%s211 + $0x58] sm:$0xff] %v1588
        %1703 = vst [vmem:[%s211 + $0x60] sm:$0xff] %v1593
        %1704 = vst [vmem:[%s211 + $0x68] sm:$0xff] %v1598
        %1705 = vst [vmem:[%s211 + $0x70] sm:$0xff] %v1603
        %1706 = vst [vmem:[%s211 + $0x78] sm:$0xff] %v1608
        %1707 = vst [vmem:[%s211 + $0x80] sm:$0xff] %v1613
        %1708 = vst [vmem:[%s211 + $0x88] sm:$0xff] %v1618
        %1709 = vst [vmem:[%s211 + $0x90] sm:$0xff] %v1623
        %1710 = vst [vmem:[%s211 + $0x98] sm:$0xff] %v1628
        %1711 = vst [vmem:[%s211 + $0xa0] sm:$0xff] %v1633
        %1712 = vst [vmem:[%s211 + $0xa8] sm:$0xff] %v1638
        %1713 = vst [vmem:[%s211 + $0xb0] sm:$0xff] %v1643
        %1714 = vst [vmem:[%s211 + $0xb8] sm:$0xff] %v1648
        %1715 = vst [vmem:[%s211 + $0xc0] sm:$0xff] %v1653
        %1716 = vst [vmem:[%s211 + $0xc8] sm:$0xff] %v1658
        %1717 = vst [vmem:[%s211 + $0xd0] sm:$0xff] %v1663
        %1718 = vst [vmem:[%s211 + $0xd8] sm:$0xff] %v1668
        %1719 = vst [vmem:[%s211 + $0xe0] sm:$0xff] %v1673
        %1720 = vst [vmem:[%s211 + $0xe8] sm:$0xff] %v1678
        %1721 = vst [vmem:[%s211 + $0xf0] sm:$0xff] %v1683
        %1722 = vst [vmem:[%s211 + $0xf8] sm:$0xff] %v1688
        %s1723 = sand.u32 %s118, 1
        %s1724 = scalar_lea.sflag [#allocation9], %s1723
        %s1725 = sand.u32 %s118, 1
        %s1726 = smul.addr %s1725, 256
        %s1727 = scalar_lea.vmem [#allocation12], %s1726
        // Predicated region
        $region67: #{tpu_custom_call.1} parent=35 // pred_check
          %p1728 = pneg %p128
        $region68: #{tpu_custom_call.1} parent=35 // pred_check_branch
          %1730 = sbr.rel (%p1728) target = $region70
        $region69: #{tpu_custom_call.1} parent=35 // pred_region
          %s1731 = smul.u32 32, %s26
          %s1733 = ssub.s32 4096, 4096
          %1734 = vsyncadd %s1724, %s1733
          %s1735 = smul.addr %s1731, 128
          %s1736 = scalar_lea.hbm %s6, %s1735
          %s1737 = sshll.u32 %s1727, 4
          %s1738 = int_to_ptr.vmem [resolvable:$true] %s1737
          %1743 = dma.vmem_to_hbm [thread:$0]  %s1738, 4096, %s1736, %s1724, 128, 128, 8
        $region70: #{tpu_custom_call.1} parent=35 // pred_fallthru
          _
      $region36: #{tpu_custom_call.1} parent=5 // pred_fallthru
        _
      %p1744 = scmp.le.s32.totalorder 2, %s21
      // Predicated region
      $region71: #{tpu_custom_call.1} parent=5 // pred_check
        %p1745 = pneg %p1744
      $region72: #{tpu_custom_call.1} parent=5 // pred_check_branch
        %1747 = sbr.rel (%p1745) target = $region74
      $region73: #{tpu_custom_call.1} parent=5 // pred_region
        %s1748 = ssub.s32 %s21, 2
        // Predicated region
        $region75: #{tpu_custom_call.1} parent=73 // pred_check
          %p1749 = pneg %p134
        $region76: #{tpu_custom_call.1} parent=73 // pred_check_branch
          %1751 = sbr.rel (%p1749) target = $region78
        $region77: #{tpu_custom_call.1} parent=73 // pred_region
          %s1752 = sand.u32 %s119, 1
          %s1753 = scalar_lea.sflag [#allocation9], %s1752
          %s1754 = sand.u32 %s119, 1
          %s1755 = smul.addr %s1754, 256
          %s1756 = scalar_lea.vmem [#allocation12], %s1755
          %1757 = dma.done %s1753, 4096
        $region78: #{tpu_custom_call.1} parent=73 // pred_fallthru
          _
      $region74: #{tpu_custom_call.1} parent=5 // pred_fallthru
        _
    $region6: #{tpu_custom_call.1} parent=1 // loop_footer
      %s25 = sadd.s32 1, %s21
    $region7: #{tpu_custom_call.1} parent=1 // loop_footer_branch
      %20 = sbr.rel target = $region3
    $region8: #{tpu_custom_call.1} parent=1 // loop_exit
      _
    %1758 = vsyncpa [#allocation8], 1
    %s1759 = scalar_lea.sflag [#allocation8], 1
    %1760 = vsyncpa %s1759, 1
    %1761 = vsyncpa [#allocation11], 1
    %1762 = vsyncpa [#allocation9], 1
    %s1763 = scalar_lea.sflag [#allocation9], 1
    %1764 = vsyncpa %s1763, 1
  %1765 = vsyncmov [#allocation4]
  %s1766 = vpop.sfrf %1765
  %p1767 = scmp.eq.s32.totalorder %s1766, 0
  %p1768 = pneg %p1767
  %1770 = shalt.err (%p1768)
  %s1771 = scalar_lea.sflag [#allocation4], 1
  %1772 = vsyncmov %s1771
  %s1773 = vpop.sfrf %1772
  %p1774 = scmp.eq.s32.totalorder %s1773, 0
  %p1775 = pneg %p1774
  %1777 = shalt.err (%p1775)

</llo_original>
